<compile_context>
chip_gen: v6e
topology: v6e:2x2x1
jax: 0.10.0
libtpu: 0.0.40
codegen_flags: <defaults>
</compile_context>

<pallas_src>
import functools

import jax
import jax.numpy as jnp
from jax.experimental import pallas as pl
from jax.experimental.pallas import tpu as pltpu


# ------------------------------ helpers ------------------------------------- #
def _round_up(x, m):
    return (x + m - 1) // m * m


def _pad2d(m, rows, cols):
    """Zero-pad a 2-D array up to (rows, cols); no-op if already that shape."""
    r, c = m.shape
    if r == rows and c == cols:
        return m
    return jnp.zeros((rows, cols), m.dtype).at[:r, :c].set(m)


@functools.lru_cache(maxsize=None)
def _tpu_generation():
    try:
        kind = jax.devices()[0].device_kind.lower()
    except Exception:
        return 0
    if "v6" in kind:
        return 6
    if "v5" in kind:
        return 5
    if "v7" in kind or "tpu7" in kind or "7x" in kind:
        return 7
    return 0


def _tile_caps(gen):
    """(M/N tile cap, K tile cap, VMEM-limit cap bytes) per TPU generation."""
    if gen == 7:
        # 64 MiB physical VMEM per TensorCore: keep scoped limit well under it.
        return 512, 512, 40 * 2**20
    if gen in (5, 6):
        # 128 MiB VMEM: larger output tiles cut A re-reads / grid-step overhead.
        return 1024, 512, 100 * 2**20
    return 512, 512, 48 * 2**20


def _pick_tile(dim, cap):
    """Largest tile in {1024,512,256,128} <= cap dividing `dim` (dim % 128 == 0)."""
    cap = max(cap, 128)
    for t in (1024, 512, 256, 128):
        if t <= cap and dim % t == 0:
            return t
    return 128


# ----------------------- fused GCN layer kernel ------------------------------ #
def _gcn_fused_kernel(a_ref, x_ref, w_ref, bias_ref, o_ref, acc_ref, *, apply_relu):
    """Accumulate H = A @ X over the node-reduction axis; epilogue applies the
    feature projection, bias and optional ReLU: out = relu(H @ W + b)."""
    k = pl.program_id(1)

    @pl.when(k == 0)
    def _():
        acc_ref[...] = jnp.zeros_like(acc_ref)

    # bf16 x bf16 -> f32 accumulate on the MXU.
    acc_ref[...] += jnp.dot(a_ref[...], x_ref[...],
                            preferred_element_type=jnp.float32)

    @pl.when(k == pl.num_programs(1) - 1)
    def _():
        h = acc_ref[...].astype(jnp.bfloat16)            # back to MXU operand dtype
        out = jnp.dot(h, w_ref[...], preferred_element_type=jnp.float32)
        out = out + bias_ref[...].astype(jnp.float32)    # f32 epilogue (v5e-safe)
        if apply_relu:
            out = jnp.maximum(out, 0.0)
        o_ref[...] = out.astype(o_ref.dtype)


def gcn_conv_fused(a_p, x_p, w_p, b_p, *, apply_relu, out_dtype):
    """One GCNConv as a single pallas_call: relu?((A @ X) @ W + b).

    a_p: [Np, Np] bf16, x_p: [Np, Fin_p] bf16, w_p: [Fin_p, Fout_p] bf16,
    b_p: [1, Fout_p] f32. All dims multiples of 128 (pre-padded by caller).
    """
    Mp, Kp = a_p.shape
    Kp2, Fin = x_p.shape
    Fin2, Fout = w_p.shape
    assert Kp == Kp2 and Fin == Fin2, (a_p.shape, x_p.shape, w_p.shape)
    assert a_p.dtype == jnp.bfloat16 and x_p.dtype == jnp.bfloat16
    assert w_p.dtype == jnp.bfloat16 and b_p.shape == (1, Fout)

    gen = _tpu_generation()
    mn_cap, k_cap, vmem_cap = _tile_caps(gen)
    tm_cap = mn_cap
    if gen == 7 and Mp >= 256:
        tm_cap = min(tm_cap, Mp // 2)   # >=2 blocks on the parallel axis (megacore)
    tm = _pick_tile(Mp, tm_cap)
    tk = _pick_tile(Kp, k_cap)
    grid = (Mp // tm, Kp // tk)

    out_bytes = jnp.dtype(out_dtype).itemsize
    est_vmem = (2 * tm * tk * 2           # A tiles (bf16, double-buffered)
                + 2 * tk * Fin * 2        # X tiles
                + 2 * Fin * Fout * 2      # resident W (conservatively x2)
                + 2 * Fout * 4            # bias
                + tm * Fin * 4            # f32 accumulator
                + 2 * tm * Fout * out_bytes)
    vmem_limit = int(min(vmem_cap, max(32 * 2**20, 2 * est_vmem)))

    kernel = functools.partial(_gcn_fused_kernel, apply_relu=apply_relu)

    return pl.pallas_call(
        kernel,
        out_shape=jax.ShapeDtypeStruct((Mp, Fout), out_dtype),
        grid_spec=pltpu.PrefetchScalarGridSpec(
            num_scalar_prefetch=0,
            grid=grid,
            in_specs=[
                pl.BlockSpec((tm, tk), lambda i, k: (i, k)),      # A
                pl.BlockSpec((tk, Fin), lambda i, k: (k, 0)),     # X
                pl.BlockSpec((Fin, Fout), lambda i, k: (0, 0)),   # W (resident)
                pl.BlockSpec((1, Fout), lambda i, k: (0, 0)),     # bias (resident)
            ],
            out_specs=pl.BlockSpec((tm, Fout), lambda i, k: (i, 0)),
            scratch_shapes=[pltpu.VMEM((tm, Fin), jnp.float32)],
        ),
        compiler_params=pltpu.CompilerParams(
            dimension_semantics=("parallel", "arbitrary"),
            vmem_limit_bytes=vmem_limit,
        ),
        cost_estimate=pl.CostEstimate(
            flops=2 * Mp * Kp * Fin + 2 * Mp * Fin * Fout,
            transcendentals=0,
            bytes_accessed=int((Mp * Kp + Kp * Fin + Fin * Fout) * 2
                               + Fout * 4 + Mp * Fout * out_bytes),
        ),
    )(a_p, x_p, w_p, b_p)


# ----------------------- generic tiled matmul kernel ------------------------- #
def _matmul_kernel(*refs, apply_relu, has_bias):
    if has_bias:
        a_ref, b_ref, bias_ref, o_ref, acc_ref = refs
    else:
        a_ref, b_ref, o_ref, acc_ref = refs
    k = pl.program_id(2)

    @pl.when(k == 0)
    def _():
        acc_ref[...] = jnp.zeros_like(acc_ref)

    acc_ref[...] += jnp.dot(a_ref[...], b_ref[...],
                            preferred_element_type=jnp.float32)

    @pl.when(k == pl.num_programs(2) - 1)
    def _():
        out = acc_ref[...]
        if has_bias:
            out = out + bias_ref[...].astype(jnp.float32)
        if apply_relu:
            out = jnp.maximum(out, 0.0)
        o_ref[...] = out.astype(o_ref.dtype)


def matmul_padded(a_p, b_p, bias_p=None, *, apply_relu=False, out_dtype=jnp.float32):
    """out = a_p @ b_p (+ bias) (+ ReLU). Operands must be pre-padded bf16 with
    all dims multiples of 128; bias_p (if any) is [1, Np] f32."""
    Mp, Kp = a_p.shape
    Kp2, Np = b_p.shape
    assert Kp == Kp2, (a_p.shape, b_p.shape)
    assert Mp % 128 == 0 and Kp % 128 == 0 and Np % 128 == 0
    assert a_p.dtype == jnp.bfloat16 and b_p.dtype == jnp.bfloat16

    gen = _tpu_generation()
    mn_cap, k_cap, vmem_cap = _tile_caps(gen)
    tm_cap = mn_cap
    if gen == 7 and Mp >= 256:
        tm_cap = min(tm_cap, Mp // 2)   # >=2 blocks on a parallel axis (megacore)
    tm = _pick_tile(Mp, tm_cap)
    tn = _pick_tile(Np, mn_cap)
    tk = _pick_tile(Kp, k_cap)
    grid = (Mp // tm, Np // tn, Kp // tk)

    has_bias = bias_p is not None
    out_bytes = jnp.dtype(out_dtype).itemsize
    est_vmem = (2 * (tm * tk + tk * tn) * 2
                + tm * tn * 4
                + 2 * tm * tn * out_bytes
                + (2 * tn * 4 if has_bias else 0))
    vmem_limit = int(min(vmem_cap, max(32 * 2**20, 2 * est_vmem)))

    in_specs = [
        pl.BlockSpec((tm, tk), lambda i, j, k: (i, k)),   # a
        pl.BlockSpec((tk, tn), lambda i, j, k: (k, j)),   # b
    ]
    operands = [a_p, b_p]
    if has_bias:
        assert bias_p.shape == (1, Np)
        in_specs.append(pl.BlockSpec((1, tn), lambda i, j, k: (0, j)))
        operands.append(bias_p)

    kernel = functools.partial(_matmul_kernel, apply_relu=apply_relu,
                               has_bias=has_bias)

    bytes_accessed = (Mp * Kp + Kp * Np) * 2 + Mp * Np * out_bytes
    if has_bias:
        bytes_accessed += Np * 4

    return pl.pallas_call(
        kernel,
        out_shape=jax.ShapeDtypeStruct((Mp, Np), out_dtype),
        grid_spec=pltpu.PrefetchScalarGridSpec(
            num_scalar_prefetch=0,
            grid=grid,
            in_specs=in_specs,
            out_specs=pl.BlockSpec((tm, tn), lambda i, j, k: (i, j)),
            scratch_shapes=[pltpu.VMEM((tm, tn), jnp.float32)],
        ),
        compiler_params=pltpu.CompilerParams(
            dimension_semantics=("parallel", "parallel", "arbitrary"),
            vmem_limit_bytes=vmem_limit,
        ),
        cost_estimate=pl.CostEstimate(
            flops=2 * Mp * Np * Kp,
            transcendentals=0,
            bytes_accessed=int(bytes_accessed),
        ),
    )(*operands)


# ------------------------------- glue (JAX) --------------------------------- #
def normalized_adjacency(edge_index, num_nodes, dtype=jnp.float32):
    """D^{-1/2} (A + I) D^{-1/2}, dense.

    Matches PyG gcn_norm's add_remaining_self_loops semantics: pre-existing
    self-loops are replaced by a single weight-1 self-loop (not doubled).
    """
    src = edge_index[0]
    dst = edge_index[1]
    not_loop = (src != dst).astype(jnp.float32)
    # messages flow source -> target, so dense row = target, col = source
    adj = jnp.zeros((num_nodes, num_nodes), jnp.float32).at[dst, src].add(not_loop)
    adj = adj + jnp.eye(num_nodes, dtype=jnp.float32)
    deg = adj.sum(axis=1)
    dinv = jnp.where(deg > 0, jax.lax.rsqrt(deg), 0.0)
    return (dinv[:, None] * adj * dinv[None, :]).astype(dtype)


def init_gcn_params(key, in_dim, hid_dim, out_dim, n_layers):
    """Glorot-uniform weights, matching GCN.__init__ layer structure.

    PyG zero-inits the GCNConv bias; small random biases are used here so the
    fused bias-add path is actually exercised (init values do not change the
    forward-pass semantics being tested).
    """
    dims = [(in_dim, hid_dim)]
    if n_layers > 1:
        for _ in range(n_layers - 2):
            dims.append((hid_dim, hid_dim))
        dims.append((hid_dim, out_dim))
    params = []
    for (fi, fo) in dims:
        key, wk, bk = jax.random.split(key, 3)
        limit = jnp.sqrt(6.0 / (fi + fo))
        w = jax.random.uniform(wk, (fi, fo), jnp.float32, -limit, limit)
        b = 0.1 * jax.random.normal(bk, (1, fo), jnp.float32)
        params.append((w, b))
    return params


def gcn_forward(params, x, edge_index):
    """Mirrors GCN.forward: ReLU between convs, no activation after the last.

    A_norm / X / W / b are padded to multiples of 128 and cast to bf16/f32
    exactly once; intermediate activations stay padded bf16 between layers.
    """
    n, f_in = x.shape
    n_p = _round_up(n, 128)

    a = normalized_adjacency(edge_index, n, dtype=jnp.float32)
    a_p = _pad2d(a.astype(jnp.bfloat16), n_p, n_p)          # pad + cast once
    h_p = _pad2d(x.astype(jnp.bfloat16), n_p, _round_up(f_in, 128))

    n_layers = len(params)
    out_p = None
    for li, (w, b) in enumerate(params):
        fi, fo = w.shape
        fi_p, fo_p = _round_up(fi, 128), _round_up(fo, 128)
        w_p = _pad2d(w.astype(jnp.bfloat16), fi_p, fo_p)
        b_p = _pad2d(b.reshape(1, fo).astype(jnp.float32), 1, fo_p)

        last = li == n_layers - 1
        relu = not last
        out_dtype = jnp.float32 if last else jnp.bfloat16

        if fi_p <= fo_p:
            # Fused: single pallas_call, no HBM round-trip of the N x F intermediate.
            out_p = gcn_conv_fused(a_p, h_p, w_p, b_p,
                                   apply_relu=relu, out_dtype=out_dtype)
        else:
            # Narrow-first: project features before the N^2 aggregation
            # (less aggregation compute + traffic when f_in >> f_out);
            # bias + ReLU are fused into the aggregation's epilogue.
            xw_p = matmul_padded(h_p, w_p, None, apply_relu=False,
                                 out_dtype=jnp.bfloat16)
            out_p = matmul_padded(a_p, xw_p, b_p, apply_relu=relu,
                                  out_dtype=out_dtype)
        h_p = out_p   # already padded + bf16: no re-pad / re-cast for next layer

    fo_final = params[-1][0].shape[1]
    return out_p[:n, :fo_final]


# ------------------------- pure-JAX reference -------------------------------- #
def ref_gcn_forward(params, x, edge_index):
    """Same bf16-operand / f32-accumulate recipe, plain XLA ops."""
    n = x.shape[0]
    a = normalized_adjacency(edge_index, n, dtype=jnp.float32).astype(jnp.bfloat16)

    def mm(p, q):
        return jnp.dot(p.astype(jnp.bfloat16), q.astype(jnp.bfloat16),
                       preferred_element_type=jnp.float32)

    h = x
    n_layers = len(params)
    out = None
    for li, (w, b) in enumerate(params):
        fi, fo = w.shape
        if _round_up(fi, 128) <= _round_up(fo, 128):
            out = mm(mm(a, h), w) + b
        else:
            out = mm(a, mm(h, w)) + b
        if li < n_layers - 1:
            h = jnp.maximum(out, 0.0).astype(jnp.bfloat16)
    return out


# --------------------------------- main -------------------------------------- #
if __name__ == "__main__":
    key = jax.random.PRNGKey(0)
    k_x, k_e, k_p, k_x2, k_p2 = jax.random.split(key, 5)

    fwd = jax.jit(gcn_forward)

    # --- Spec configuration: hid_dim = out_dim = 512, n_layers = 1 ----------- #
    N, E = 256, 1024
    IN_DIM, HID_DIM, OUT_DIM, N_LAYERS = 96, 512, 512, 1

    x = jax.random.normal(k_x, (N, IN_DIM), jnp.float32)
    edge_index = jax.random.randint(k_e, (2, E), 0, N, dtype=jnp.int32)
    params = init_gcn_params(k_p, IN_DIM, HID_DIM, OUT_DIM, N_LAYERS)

    out = jax.block_until_ready(fwd(params, x, edge_index))
    ref = ref_gcn_forward(params, x, edge_index)
    assert out.shape == (N, HID_DIM), out.shape
    err = float(jnp.max(jnp.abs(out - ref)))
    assert jnp.allclose(out, ref, atol=2e-2, rtol=2e-2), err

    # --- Multi-layer config exercising ReLU + the f_in > f_out fallback ------ #
    IN2, HID2, OUT2, NL2 = 384, 128, 192, 3
    x2 = jax.random.normal(k_x2, (N, IN2), jnp.float32)
    params2 = init_gcn_params(k_p2, IN2, HID2, OUT2, NL2)

    out2 = jax.block_until_ready(fwd(params2, x2, edge_index))
    ref2 = ref_gcn_forward(params2, x2, edge_index)
    assert out2.shape == (N, OUT2), out2.shape
    err2 = float(jnp.max(jnp.abs(out2 - ref2)))
    assert jnp.allclose(out2, ref2, atol=2e-2, rtol=2e-2), err2

    print("KERNEL_OK")
</pallas_src>

<mosaic_0001>
module attributes {stable_mosaic.version = 11 : i64} {
  func.func private @main(%arg0: i32) attributes {dimension_semantics = [#tpu.dimension_semantics<core_parallel>], iteration_bounds = array<i64: 2>, tpu.core_type = #tpu.core_type<sc_scalar_subcore>, window_params = []} {
    return
  }
}

module attributes {stable_mosaic.version = 11 : i64} {
  func.func private @main(%arg0: i32) attributes {dimension_semantics = [#tpu.dimension_semantics<core_parallel>], iteration_bounds = array<i64: 2>, tpu.core_type = #tpu.core_type<sc_scalar_subcore>, window_params = []} {
    return
  }
}

module attributes {stable_mosaic.version = 11 : i64} {
  func.func @_gcn_fused_kernel(%arg0: i32, %arg1: i32, %arg2: memref<256x256xbf16, #tpu.memory_space<vmem>>, %arg3: memref<256x128xbf16, #tpu.memory_space<vmem>>, %arg4: memref<128x512xbf16, #tpu.memory_space<vmem>>, %arg5: memref<1x512xf32, #tpu.memory_space<vmem>>, %arg6: memref<256x512xf32, #tpu.memory_space<vmem>>, %arg7: memref<256x128xf32, #tpu.memory_space<vmem>>) attributes {dimension_semantics = [#tpu.dimension_semantics<parallel>, #tpu.dimension_semantics<arbitrary>], iteration_bounds = array<i64: 1, 1>, scalar_prefetch = 0 : i64, scratch_operands = 1 : i64, tpu.core_type = #tpu.core_type<tc>, window_params = [{transform_indices = @transform_0, window_bounds = array<i64: 256, 256>}, {transform_indices = @transform_1, window_bounds = array<i64: 256, 128>}, {pipeline_mode = #tpu.pipeline_mode<synchronous>, transform_indices = @transform_2, window_bounds = array<i64: 128, 512>}, {pipeline_mode = #tpu.pipeline_mode<synchronous>, transform_indices = @transform_3, window_bounds = array<i64: 1, 512>}, {transform_indices = @transform_4, window_bounds = array<i64: 256, 512>}]} {
    %c0_i32 = arith.constant 0 : i32
    %0 = arith.cmpi eq, %arg1, %c0_i32 : i32
    %1 = arith.extui %0 : i1 to i32
    %c0_i32_0 = arith.constant 0 : i32
    %2 = arith.cmpi ne, %1, %c0_i32_0 : i32
    scf.if %2 {
      %cst_10 = arith.constant 0.000000e+00 : f32
      %12 = vector.broadcast %cst_10 : f32 to vector<256x128xf32>
      %c0_11 = arith.constant 0 : index
      %c0_12 = arith.constant 0 : index
      %13 = vector.load %arg7[%c0_11, %c0_12] : memref<256x128xf32, #tpu.memory_space<vmem>>, vector<256x128xf32>
      tpu.vector_store %arg7[%c0_11, %c0_12], %12 {strides = array<i32>} : memref<256x128xf32, #tpu.memory_space<vmem>>, vector<256x128xf32>,
    } else {
    }
    %c0 = arith.constant 0 : index
    %c0_1 = arith.constant 0 : index
    %3 = vector.load %arg7[%c0, %c0_1] : memref<256x128xf32, #tpu.memory_space<vmem>>, vector<256x128xf32>
    %c0_2 = arith.constant 0 : index
    %c0_3 = arith.constant 0 : index
    %4 = vector.load %arg2[%c0_2, %c0_3] : memref<256x256xbf16, #tpu.memory_space<vmem>>, vector<256x256xbf16>
    %c0_4 = arith.constant 0 : index
    %c0_5 = arith.constant 0 : index
    %5 = vector.load %arg3[%c0_4, %c0_5] : memref<256x128xbf16, #tpu.memory_space<vmem>>, vector<256x128xbf16>
    %cst = arith.constant dense<0.000000e+00> : vector<256x128xf32>
    %6 = tpu.matmul %4, %5, %cst {dimension_numbers = #tpu.dot_dimension_numbers<[1], [0], [0], [1], [0, 0, 1, 1], [], []>} : vector<256x256xbf16>, vector<256x128xbf16>, vector<256x128xf32> -> vector<256x128xf32>
    %7 = arith.addf %3, %6 : vector<256x128xf32>
    %c0_6 = arith.constant 0 : index
    %c0_7 = arith.constant 0 : index
    %8 = vector.load %arg7[%c0_6, %c0_7] : memref<256x128xf32, #tpu.memory_space<vmem>>, vector<256x128xf32>
    tpu.vector_store %arg7[%c0_6, %c0_7], %7 {strides = array<i32>} : memref<256x128xf32, #tpu.memory_space<vmem>>, vector<256x128xf32>,
    %c0_i32_8 = arith.constant 0 : i32
    %9 = arith.cmpi eq, %arg1, %c0_i32_8 : i32
    %10 = arith.extui %9 : i1 to i32
    %c0_i32_9 = arith.constant 0 : i32
    %11 = arith.cmpi ne, %10, %c0_i32_9 : i32
    scf.if %11 {
      %c0_10 = arith.constant 0 : index
      %c0_11 = arith.constant 0 : index
      %12 = vector.load %arg7[%c0_10, %c0_11] : memref<256x128xf32, #tpu.memory_space<vmem>>, vector<256x128xf32>
      %13 = arith.truncf %12 : vector<256x128xf32> to vector<256x128xbf16>
      %c0_12 = arith.constant 0 : index
      %c0_13 = arith.constant 0 : index
      %14 = vector.load %arg4[%c0_12, %c0_13] : memref<128x512xbf16, #tpu.memory_space<vmem>>, vector<128x512xbf16>
      %cst_14 = arith.constant dense<0.000000e+00> : vector<256x512xf32>
      %15 = tpu.matmul %13, %14, %cst_14 {dimension_numbers = #tpu.dot_dimension_numbers<[1], [0], [0], [1], [0, 0, 1, 1], [], []>} : vector<256x128xbf16>, vector<128x512xbf16>, vector<256x512xf32> -> vector<256x512xf32>
      %c0_15 = arith.constant 0 : index
      %c0_16 = arith.constant 0 : index
      %16 = vector.load %arg5[%c0_15, %c0_16] : memref<1x512xf32, #tpu.memory_space<vmem>>, vector<1x512xf32>
      %17 = vector.broadcast %16 : vector<1x512xf32> to vector<256x512xf32>
      %18 = arith.addf %15, %17 : vector<256x512xf32>
      %c0_17 = arith.constant 0 : index
      %c0_18 = arith.constant 0 : index
      %19 = vector.load %arg6[%c0_17, %c0_18] : memref<256x512xf32, #tpu.memory_space<vmem>>, vector<256x512xf32>
      tpu.vector_store %arg6[%c0_17, %c0_18], %18 {strides = array<i32>} : memref<256x512xf32, #tpu.memory_space<vmem>>, vector<256x512xf32>,
    } else {
    }
    return
  }
  func.func @transform_0(%arg0: i32, %arg1: i32) -> (i32, i32) {
    %c0_i32 = arith.constant 0 : i32
    return %arg0, %arg1 : i32, i32
  }
  func.func @transform_1(%arg0: i32, %arg1: i32) -> (i32, i32) {
    %c0_i32 = arith.constant 0 : i32
    %c0_i32_0 = arith.constant 0 : i32
    return %arg1, %c0_i32 : i32, i32
  }
  func.func @transform_2(%arg0: i32, %arg1: i32) -> (i32, i32) {
    %c0_i32 = arith.constant 0 : i32
    %c0_i32_0 = arith.constant 0 : i32
    %c0_i32_1 = arith.constant 0 : i32
    return %c0_i32, %c0_i32_0 : i32, i32
  }
  func.func @transform_3(%arg0: i32, %arg1: i32) -> (i32, i32) {
    %c0_i32 = arith.constant 0 : i32
    %c0_i32_0 = arith.constant 0 : i32
    %c0_i32_1 = arith.constant 0 : i32
    return %c0_i32, %c0_i32_0 : i32, i32
  }
  func.func @transform_4(%arg0: i32, %arg1: i32) -> (i32, i32) {
    %c0_i32 = arith.constant 0 : i32
    %c0_i32_0 = arith.constant 0 : i32
    return %arg0, %c0_i32 : i32, i32
  }
}

</mosaic_0001>

<llo_original>
// kernel: gcn_forward.1
$region0: #{gcn_forward.1}
  #allocation0 [shape = 'u32[]', space=smem, size = 0x4, offset = 0x4, fixed_abs, tag = 'smem constant byte address 0x4 - core index']
  #allocation1 [shape = 'u32[144,128]{1,0:T(1,128)}', space=vmem, size = 0x12000, scoped, tag = 'internal scratch']
  #allocation2 [shape = 'f32[256,128]{1,0:T(8,128)}', space=vmem, size = 0x20000, scoped, tag = 'scratch operand']
  %s0 = inlined_call_operand.vmem [shape: bf16[256,256], index: 0, kind: input, shape index: {}]
  %s1 = inlined_call_operand.vmem [shape: bf16[256,128], index: 1, kind: input, shape index: {}]
  %s2 = inlined_call_operand.vmem [shape: bf16[128,512], index: 2, kind: input, shape index: {}]
  %s3 = inlined_call_operand.vmem [shape: f32[1,512], index: 3, kind: input, shape index: {}]
  %s4 = inlined_call_operand.hbm [shape: f32[256,512], index: 4, kind: output, shape index: {}]
  %s5 = sld [smem:[#allocation0]]
  $region34: #{gcn_forward.1} parent=0
    _
  %s7 = ssub.s32 1, %s5
  %s8 = scalar_select 0, %s7, %s5
  $region1: #{gcn_forward.1} parent=0
    #allocation3 [shape = 'u8[524288]{0}', space=vmem, size = 0x80000, scoped, tag = 'output window, operand 0, single buffered']
    #allocation4 [shape = 's32[1]{0}', space=sflag, size = 0x4, scoped, tag = 'scoped memory for gcn_forward.1']
    %9 = vsyncpa [#allocation4], 0
    // Predicated region
    $region2: #{gcn_forward.1} parent=1 // pred_check
      _
    $region3: #{gcn_forward.1} parent=1 // pred_check_branch
      %11 = sbr.rel (0) target = $region5
    $region4: #{gcn_forward.1} parent=1 // pred_region
      _
    $region5: #{gcn_forward.1} parent=1 // pred_fallthru
      _
    // Predicated region
    $region6: #{gcn_forward.1} parent=1 // pred_check
      _
    $region7: #{gcn_forward.1} parent=1 // pred_check_branch
      %13 = sbr.rel (0) target = $region9
    $region8: #{gcn_forward.1} parent=1 // pred_region
      _
    $region9: #{gcn_forward.1} parent=1 // pred_fallthru
      _
    // Predicated region
    $region10: #{gcn_forward.1} parent=1 // pred_check
      _
    $region11: #{gcn_forward.1} parent=1 // pred_check_branch
      %15 = sbr.rel (0) target = $region13
    $region12: #{gcn_forward.1} parent=1 // pred_region
      _
    $region13: #{gcn_forward.1} parent=1 // pred_fallthru
      _
    // Predicated region
    $region14: #{gcn_forward.1} parent=1 // pred_check
      _
    $region15: #{gcn_forward.1} parent=1 // pred_check_branch
      %17 = sbr.rel (0) target = $region17
    $region16: #{gcn_forward.1} parent=1 // pred_region
      _
    $region17: #{gcn_forward.1} parent=1 // pred_fallthru
      _
    %p19 = scmp.eq.s32.totalorder 0, 0
    // Predicated region
    $region18: #{gcn_forward.1} parent=1 // pred_check
      %p20 = pneg %p19
    $region19: #{gcn_forward.1} parent=1 // pred_check_branch
      %22 = sbr.rel (%p20) target = $region21
    $region20: #{gcn_forward.1} parent=1 // pred_region
      %23 = vst [vmem:[#allocation2] sm:$0xff] 0.0
      %24 = vst [vmem:[#allocation2 + $0x8] sm:$0xff] 0.0
      %25 = vst [vmem:[#allocation2 + $0x10] sm:$0xff] 0.0
      %26 = vst [vmem:[#allocation2 + $0x18] sm:$0xff] 0.0
      %27 = vst [vmem:[#allocation2 + $0x20] sm:$0xff] 0.0
      %28 = vst [vmem:[#allocation2 + $0x28] sm:$0xff] 0.0
      %29 = vst [vmem:[#allocation2 + $0x30] sm:$0xff] 0.0
      %30 = vst [vmem:[#allocation2 + $0x38] sm:$0xff] 0.0
      %31 = vst [vmem:[#allocation2 + $0x40] sm:$0xff] 0.0
      %32 = vst [vmem:[#allocation2 + $0x48] sm:$0xff] 0.0
      %33 = vst [vmem:[#allocation2 + $0x50] sm:$0xff] 0.0
      %34 = vst [vmem:[#allocation2 + $0x58] sm:$0xff] 0.0
      %35 = vst [vmem:[#allocation2 + $0x60] sm:$0xff] 0.0
      %36 = vst [vmem:[#allocation2 + $0x68] sm:$0xff] 0.0
      %37 = vst [vmem:[#allocation2 + $0x70] sm:$0xff] 0.0
      %38 = vst [vmem:[#allocation2 + $0x78] sm:$0xff] 0.0
      %39 = vst [vmem:[#allocation2 + $0x80] sm:$0xff] 0.0
      %40 = vst [vmem:[#allocation2 + $0x88] sm:$0xff] 0.0
      %41 = vst [vmem:[#allocation2 + $0x90] sm:$0xff] 0.0
      %42 = vst [vmem:[#allocation2 + $0x98] sm:$0xff] 0.0
      %43 = vst [vmem:[#allocation2 + $0xa0] sm:$0xff] 0.0
      %44 = vst [vmem:[#allocation2 + $0xa8] sm:$0xff] 0.0
      %45 = vst [vmem:[#allocation2 + $0xb0] sm:$0xff] 0.0
      %46 = vst [vmem:[#allocation2 + $0xb8] sm:$0xff] 0.0
      %47 = vst [vmem:[#allocation2 + $0xc0] sm:$0xff] 0.0
      %48 = vst [vmem:[#allocation2 + $0xc8] sm:$0xff] 0.0
      %49 = vst [vmem:[#allocation2 + $0xd0] sm:$0xff] 0.0
      %50 = vst [vmem:[#allocation2 + $0xd8] sm:$0xff] 0.0
      %51 = vst [vmem:[#allocation2 + $0xe0] sm:$0xff] 0.0
      %52 = vst [vmem:[#allocation2 + $0xe8] sm:$0xff] 0.0
      %53 = vst [vmem:[#allocation2 + $0xf0] sm:$0xff] 0.0
      %54 = vst [vmem:[#allocation2 + $0xf8] sm:$0xff] 0.0
    $region21: #{gcn_forward.1} parent=1 // pred_fallthru
      _
    %v55 = vld [vmem:[#allocation2] sm:$0xff]
    %v56 = vld [vmem:[#allocation2 + $0x8] sm:$0xff]
    %v57 = vld [vmem:[#allocation2 + $0x10] sm:$0xff]
    %v58 = vld [vmem:[#allocation2 + $0x18] sm:$0xff]
    %v59 = vld [vmem:[#allocation2 + $0x20] sm:$0xff]
    %v60 = vld [vmem:[#allocation2 + $0x28] sm:$0xff]
    %v61 = vld [vmem:[#allocation2 + $0x30] sm:$0xff]
    %v62 = vld [vmem:[#allocation2 + $0x38] sm:$0xff]
    %v63 = vld [vmem:[#allocation2 + $0x40] sm:$0xff]
    %v64 = vld [vmem:[#allocation2 + $0x48] sm:$0xff]
    %v65 = vld [vmem:[#allocation2 + $0x50] sm:$0xff]
    %v66 = vld [vmem:[#allocation2 + $0x58] sm:$0xff]
    %v67 = vld [vmem:[#allocation2 + $0x60] sm:$0xff]
    %v68 = vld [vmem:[#allocation2 + $0x68] sm:$0xff]
    %v69 = vld [vmem:[#allocation2 + $0x70] sm:$0xff]
    %v70 = vld [vmem:[#allocation2 + $0x78] sm:$0xff]
    %v71 = vld [vmem:[#allocation2 + $0x80] sm:$0xff]
    %v72 = vld [vmem:[#allocation2 + $0x88] sm:$0xff]
    %v73 = vld [vmem:[#allocation2 + $0x90] sm:$0xff]
    %v74 = vld [vmem:[#allocation2 + $0x98] sm:$0xff]
    %v75 = vld [vmem:[#allocation2 + $0xa0] sm:$0xff]
    %v76 = vld [vmem:[#allocation2 + $0xa8] sm:$0xff]
    %v77 = vld [vmem:[#allocation2 + $0xb0] sm:$0xff]
    %v78 = vld [vmem:[#allocation2 + $0xb8] sm:$0xff]
    %v79 = vld [vmem:[#allocation2 + $0xc0] sm:$0xff]
    %v80 = vld [vmem:[#allocation2 + $0xc8] sm:$0xff]
    %v81 = vld [vmem:[#allocation2 + $0xd0] sm:$0xff]
    %v82 = vld [vmem:[#allocation2 + $0xd8] sm:$0xff]
    %v83 = vld [vmem:[#allocation2 + $0xe0] sm:$0xff]
    %v84 = vld [vmem:[#allocation2 + $0xe8] sm:$0xff]
    %v85 = vld [vmem:[#allocation2 + $0xf0] sm:$0xff]
    %v86 = vld [vmem:[#allocation2 + $0xf8] sm:$0xff]
    %v87 = vld [vmem:[%s0] sm:$0xff]
    %v88 = vld [vmem:[%s0 + $0x8] sm:$0xff]
    %v89 = vld [vmem:[%s0 + $0x10] sm:$0xff]
    %v90 = vld [vmem:[%s0 + $0x18] sm:$0xff]
    %v91 = vld [vmem:[%s0 + $0x20] sm:$0xff]
    %v92 = vld [vmem:[%s0 + $0x28] sm:$0xff]
    %v93 = vld [vmem:[%s0 + $0x30] sm:$0xff]
    %v94 = vld [vmem:[%s0 + $0x38] sm:$0xff]
    %v95 = vld [vmem:[%s0 + $0x40] sm:$0xff]
    %v96 = vld [vmem:[%s0 + $0x48] sm:$0xff]
    %v97 = vld [vmem:[%s0 + $0x50] sm:$0xff]
    %v98 = vld [vmem:[%s0 + $0x58] sm:$0xff]
    %v99 = vld [vmem:[%s0 + $0x60] sm:$0xff]
    %v100 = vld [vmem:[%s0 + $0x68] sm:$0xff]
    %v101 = vld [vmem:[%s0 + $0x70] sm:$0xff]
    %v102 = vld [vmem:[%s0 + $0x78] sm:$0xff]
    %v103 = vld [vmem:[%s0 + $0x80] sm:$0xff]
    %v104 = vld [vmem:[%s0 + $0x88] sm:$0xff]
    %v105 = vld [vmem:[%s0 + $0x90] sm:$0xff]
    %v106 = vld [vmem:[%s0 + $0x98] sm:$0xff]
    %v107 = vld [vmem:[%s0 + $0xa0] sm:$0xff]
    %v108 = vld [vmem:[%s0 + $0xa8] sm:$0xff]
    %v109 = vld [vmem:[%s0 + $0xb0] sm:$0xff]
    %v110 = vld [vmem:[%s0 + $0xb8] sm:$0xff]
    %v111 = vld [vmem:[%s0 + $0xc0] sm:$0xff]
    %v112 = vld [vmem:[%s0 + $0xc8] sm:$0xff]
    %v113 = vld [vmem:[%s0 + $0xd0] sm:$0xff]
    %v114 = vld [vmem:[%s0 + $0xd8] sm:$0xff]
    %v115 = vld [vmem:[%s0 + $0xe0] sm:$0xff]
    %v116 = vld [vmem:[%s0 + $0xe8] sm:$0xff]
    %v117 = vld [vmem:[%s0 + $0xf0] sm:$0xff]
    %v118 = vld [vmem:[%s0 + $0xf8] sm:$0xff]
    %v119 = vld [vmem:[%s1] sm:$0xf]
    %v120 = vld [vmem:[%s1 + $0x4] sm:$0xf]
    %v121 = vld [vmem:[%s1 + $0x8] sm:$0xf]
    %v122 = vld [vmem:[%s1 + $0xc] sm:$0xf]
    %v123 = vld [vmem:[%s1 + $0x10] sm:$0xf]
    %v124 = vld [vmem:[%s1 + $0x14] sm:$0xf]
    %v125 = vld [vmem:[%s1 + $0x18] sm:$0xf]
    %v126 = vld [vmem:[%s1 + $0x1c] sm:$0xf]
    %v127 = vld [vmem:[%s1 + $0x20] sm:$0xf]
    %v128 = vld [vmem:[%s1 + $0x24] sm:$0xf]
    %v129 = vld [vmem:[%s1 + $0x28] sm:$0xf]
    %v130 = vld [vmem:[%s1 + $0x2c] sm:$0xf]
    %v131 = vld [vmem:[%s1 + $0x30] sm:$0xf]
    %v132 = vld [vmem:[%s1 + $0x34] sm:$0xf]
    %v133 = vld [vmem:[%s1 + $0x38] sm:$0xf]
    %v134 = vld [vmem:[%s1 + $0x3c] sm:$0xf]
    %v135 = vld [vmem:[%s1 + $0x40] sm:$0xf]
    %v136 = vld [vmem:[%s1 + $0x44] sm:$0xf]
    %v137 = vld [vmem:[%s1 + $0x48] sm:$0xf]
    %v138 = vld [vmem:[%s1 + $0x4c] sm:$0xf]
    %v139 = vld [vmem:[%s1 + $0x50] sm:$0xf]
    %v140 = vld [vmem:[%s1 + $0x54] sm:$0xf]
    %v141 = vld [vmem:[%s1 + $0x58] sm:$0xf]
    %v142 = vld [vmem:[%s1 + $0x5c] sm:$0xf]
    %v143 = vld [vmem:[%s1 + $0x60] sm:$0xf]
    %v144 = vld [vmem:[%s1 + $0x64] sm:$0xf]
    %v145 = vld [vmem:[%s1 + $0x68] sm:$0xf]
    %v146 = vld [vmem:[%s1 + $0x6c] sm:$0xf]
    %v147 = vld [vmem:[%s1 + $0x70] sm:$0xf]
    %v148 = vld [vmem:[%s1 + $0x74] sm:$0xf]
    %v149 = vld [vmem:[%s1 + $0x78] sm:$0xf]
    %v150 = vld [vmem:[%s1 + $0x7c] sm:$0xf]
    %v183 = vunpack.c.l.b16 %v87
    %v184 = vunpack.c.h.b16 %v87
    %v185 = vunpack.c.l.b16 %v88
    %v186 = vunpack.c.h.b16 %v88
    %v187 = vunpack.c.l.b16 %v89
    %v188 = vunpack.c.h.b16 %v89
    %v189 = vunpack.c.l.b16 %v90
    %v190 = vunpack.c.h.b16 %v90
    %v191 = vunpack.c.l.b16 %v91
    %v192 = vunpack.c.h.b16 %v91
    %v193 = vunpack.c.l.b16 %v92
    %v194 = vunpack.c.h.b16 %v92
    %v195 = vunpack.c.l.b16 %v93
    %v196 = vunpack.c.h.b16 %v93
    %v197 = vunpack.c.l.b16 %v94
    %v198 = vunpack.c.h.b16 %v94
    %v199 = vunpack.c.l.b16 %v95
    %v200 = vunpack.c.h.b16 %v95
    %v201 = vunpack.c.l.b16 %v96
    %v202 = vunpack.c.h.b16 %v96
    %v203 = vunpack.c.l.b16 %v97
    %v204 = vunpack.c.h.b16 %v97
    %v205 = vunpack.c.l.b16 %v98
    %v206 = vunpack.c.h.b16 %v98
    %v207 = vunpack.c.l.b16 %v99
    %v208 = vunpack.c.h.b16 %v99
    %v209 = vunpack.c.l.b16 %v100
    %v210 = vunpack.c.h.b16 %v100
    %v211 = vunpack.c.l.b16 %v101
    %v212 = vunpack.c.h.b16 %v101
    %v213 = vunpack.c.l.b16 %v102
    %v214 = vunpack.c.h.b16 %v102
    %v215 = vunpack.c.l.b16 %v103
    %v216 = vunpack.c.h.b16 %v103
    %v217 = vunpack.c.l.b16 %v104
    %v218 = vunpack.c.h.b16 %v104
    %v219 = vunpack.c.l.b16 %v105
    %v220 = vunpack.c.h.b16 %v105
    %v221 = vunpack.c.l.b16 %v106
    %v222 = vunpack.c.h.b16 %v106
    %v223 = vunpack.c.l.b16 %v107
    %v224 = vunpack.c.h.b16 %v107
    %v225 = vunpack.c.l.b16 %v108
    %v226 = vunpack.c.h.b16 %v108
    %v227 = vunpack.c.l.b16 %v109
    %v228 = vunpack.c.h.b16 %v109
    %v229 = vunpack.c.l.b16 %v110
    %v230 = vunpack.c.h.b16 %v110
    %v231 = vunpack.c.l.b16 %v111
    %v232 = vunpack.c.h.b16 %v111
    %v233 = vunpack.c.l.b16 %v112
    %v234 = vunpack.c.h.b16 %v112
    %v235 = vunpack.c.l.b16 %v113
    %v236 = vunpack.c.h.b16 %v113
    %v237 = vunpack.c.l.b16 %v114
    %v238 = vunpack.c.h.b16 %v114
    %v239 = vunpack.c.l.b16 %v115
    %v240 = vunpack.c.h.b16 %v115
    %v241 = vunpack.c.l.b16 %v116
    %v242 = vunpack.c.h.b16 %v116
    %v243 = vunpack.c.l.b16 %v117
    %v244 = vunpack.c.h.b16 %v117
    %v245 = vunpack.c.l.b16 %v118
    %v246 = vunpack.c.h.b16 %v118
    %v247 = vpack.c.b16 %v185, %v183
    %v248 = vpack.c.b16 %v186, %v184
    %v249 = vpack.c.b16 %v189, %v187
    %v250 = vpack.c.b16 %v190, %v188
    %v251 = vpack.c.b16 %v193, %v191
    %v252 = vpack.c.b16 %v194, %v192
    %v253 = vpack.c.b16 %v197, %v195
    %v254 = vpack.c.b16 %v198, %v196
    %v255 = vpack.c.b16 %v201, %v199
    %v256 = vpack.c.b16 %v202, %v200
    %v257 = vpack.c.b16 %v205, %v203
    %v258 = vpack.c.b16 %v206, %v204
    %v259 = vpack.c.b16 %v209, %v207
    %v260 = vpack.c.b16 %v210, %v208
    %v261 = vpack.c.b16 %v213, %v211
    %v262 = vpack.c.b16 %v214, %v212
    %v263 = vpack.c.b16 %v217, %v215
    %v264 = vpack.c.b16 %v218, %v216
    %v265 = vpack.c.b16 %v221, %v219
    %v266 = vpack.c.b16 %v222, %v220
    %v267 = vpack.c.b16 %v225, %v223
    %v268 = vpack.c.b16 %v226, %v224
    %v269 = vpack.c.b16 %v229, %v227
    %v270 = vpack.c.b16 %v230, %v228
    %v271 = vpack.c.b16 %v233, %v231
    %v272 = vpack.c.b16 %v234, %v232
    %v273 = vpack.c.b16 %v237, %v235
    %v274 = vpack.c.b16 %v238, %v236
    %v275 = vpack.c.b16 %v241, %v239
    %v276 = vpack.c.b16 %v242, %v240
    %v277 = vpack.c.b16 %v245, %v243
    %v278 = vpack.c.b16 %v246, %v244
    %v343 = vunpack.c.l.b16 %v119
    %v344 = vunpack.c.l.b16 %v120
    %v345 = vunpack.c.l.b16 %v121
    %v346 = vunpack.c.l.b16 %v122
    %v347 = vunpack.c.l.b16 %v123
    %v348 = vunpack.c.l.b16 %v124
    %v349 = vunpack.c.l.b16 %v125
    %v350 = vunpack.c.l.b16 %v126
    %v351 = vunpack.c.l.b16 %v127
    %v352 = vunpack.c.l.b16 %v128
    %v353 = vunpack.c.l.b16 %v129
    %v354 = vunpack.c.l.b16 %v130
    %v355 = vunpack.c.l.b16 %v131
    %v356 = vunpack.c.l.b16 %v132
    %v357 = vunpack.c.l.b16 %v133
    %v358 = vunpack.c.l.b16 %v134
    %v359 = vunpack.c.l.b16 %v135
    %v360 = vunpack.c.l.b16 %v136
    %v361 = vunpack.c.l.b16 %v137
    %v362 = vunpack.c.l.b16 %v138
    %v363 = vunpack.c.l.b16 %v139
    %v364 = vunpack.c.l.b16 %v140
    %v365 = vunpack.c.l.b16 %v141
    %v366 = vunpack.c.l.b16 %v142
    %v367 = vunpack.c.l.b16 %v143
    %v368 = vunpack.c.l.b16 %v144
    %v369 = vunpack.c.l.b16 %v145
    %v370 = vunpack.c.l.b16 %v146
    %v371 = vunpack.c.l.b16 %v147
    %v372 = vunpack.c.l.b16 %v148
    %v373 = vunpack.c.l.b16 %v149
    %v374 = vunpack.c.l.b16 %v150
    %v375 = vpack.c.b16 %v344, %v343
    %v376 = vpack.c.b16 %v346, %v345
    %v377 = vpack.c.b16 %v348, %v347
    %v378 = vpack.c.b16 %v350, %v349
    %v379 = vpack.c.b16 %v352, %v351
    %v380 = vpack.c.b16 %v354, %v353
    %v381 = vpack.c.b16 %v356, %v355
    %v382 = vpack.c.b16 %v358, %v357
    %v383 = vpack.c.b16 %v360, %v359
    %v384 = vpack.c.b16 %v362, %v361
    %v385 = vpack.c.b16 %v364, %v363
    %v386 = vpack.c.b16 %v366, %v365
    %v387 = vpack.c.b16 %v368, %v367
    %v388 = vpack.c.b16 %v370, %v369
    %v389 = vpack.c.b16 %v372, %v371
    %v390 = vpack.c.b16 %v374, %v373
    %407 = vmatprep.subr.bf16.mxu0 0
    %408 = vmatpush1.bf16.msra.mxu0 %v382
    %409 = vmatprep.subr.bf16.mxu0 0
    %410 = vmatpush1.bf16.msra.mxu0 %v381
    %411 = vmatprep.subr.bf16.mxu0 0
    %412 = vmatpush1.bf16.msra.mxu0 %v380
    %413 = vmatprep.subr.bf16.mxu0 0
    %414 = vmatpush1.bf16.msra.mxu0 %v379
    %415 = vmatprep.subr.bf16.mxu0 0
    %416 = vmatpush1.bf16.msra.mxu0 %v378
    %417 = vmatprep.subr.bf16.mxu0 0
    %418 = vmatpush1.bf16.msra.mxu0 %v377
    %419 = vmatprep.subr.bf16.mxu0 0
    %420 = vmatpush1.bf16.msra.mxu0 %v376
    %421 = vmatprep.subr.bf16.mxu0 0
    %422 = vmatpush1.bf16.msra.mxu0 %v375
    %423 = vmatprep.subr.bf16.mxu0 0
    %424 = vmatpush2.bf16.msra.mxu0 %v390
    %425 = vmatprep.subr.bf16.mxu0 0
    %426 = vmatpush2.bf16.msra.mxu0 %v389
    %427 = vmatprep.subr.bf16.mxu0 0
    %428 = vmatpush2.bf16.msra.mxu0 %v388
    %429 = vmatprep.subr.bf16.mxu0 0
    %430 = vmatpush2.bf16.msra.mxu0 %v387
    %431 = vmatprep.subr.bf16.mxu0 0
    %432 = vmatpush2.bf16.msra.mxu0 %v386
    %433 = vmatprep.subr.bf16.mxu0 0
    %434 = vmatpush2.bf16.msra.mxu0 %v385
    %435 = vmatprep.subr.bf16.mxu0 0
    %436 = vmatpush2.bf16.msra.mxu0 %v384
    %437 = vmatprep.subr.bf16.mxu0 0
    %438 = vmatpush2.bf16.msra.mxu0 %v383
    %439 = vmatprep.mubr.bf16.mxu0 %v248
    %440 = vmatmul.mubr.bf16.gmra.mxu0 %v247
    %v441 = vpop.f32.mrf.mxu0
    %v442 = vadd.f32 0.0, %v441
    %v443 = vpop.f32.mrf.mxu0
    %v444 = vpop.f32.mrf.mxu0
    %v445 = vadd.f32 0.0, %v444
    %v446 = vpop.f32.mrf.mxu0
    %447 = vmatprep.mubr.bf16.mxu0 %v250
    %448 = vmatmul.mubr.bf16.gmra.mxu0 %v249
    %v449 = vpop.f32.mrf.mxu0
    %v450 = vadd.f32 0.0, %v449
    %v451 = vpop.f32.mrf.mxu0
    %v452 = vpop.f32.mrf.mxu0
    %v453 = vadd.f32 0.0, %v452
    %v454 = vpop.f32.mrf.mxu0
    %455 = vmatprep.mubr.bf16.mxu0 %v252
    %456 = vmatmul.mubr.bf16.gmra.mxu0 %v251
    %v457 = vpop.f32.mrf.mxu0
    %v458 = vadd.f32 0.0, %v457
    %v459 = vpop.f32.mrf.mxu0
    %v460 = vpop.f32.mrf.mxu0
    %v461 = vadd.f32 0.0, %v460
    %v462 = vpop.f32.mrf.mxu0
    %463 = vmatprep.mubr.bf16.mxu0 %v254
    %464 = vmatmul.mubr.bf16.gmra.mxu0 %v253
    %v465 = vpop.f32.mrf.mxu0
    %v466 = vadd.f32 0.0, %v465
    %v467 = vpop.f32.mrf.mxu0
    %v468 = vpop.f32.mrf.mxu0
    %v469 = vadd.f32 0.0, %v468
    %v470 = vpop.f32.mrf.mxu0
    %471 = vmatprep.mubr.bf16.mxu0 %v256
    %472 = vmatmul.mubr.bf16.gmra.mxu0 %v255
    %v473 = vpop.f32.mrf.mxu0
    %v474 = vadd.f32 0.0, %v473
    %v475 = vpop.f32.mrf.mxu0
    %v476 = vpop.f32.mrf.mxu0
    %v477 = vadd.f32 0.0, %v476
    %v478 = vpop.f32.mrf.mxu0
    %479 = vmatprep.mubr.bf16.mxu0 %v258
    %480 = vmatmul.mubr.bf16.gmra.mxu0 %v257
    %v481 = vpop.f32.mrf.mxu0
    %v482 = vadd.f32 0.0, %v481
    %v483 = vpop.f32.mrf.mxu0
    %v484 = vpop.f32.mrf.mxu0
    %v485 = vadd.f32 0.0, %v484
    %v486 = vpop.f32.mrf.mxu0
    %487 = vmatprep.mubr.bf16.mxu0 %v260
    %488 = vmatmul.mubr.bf16.gmra.mxu0 %v259
    %v489 = vpop.f32.mrf.mxu0
    %v490 = vadd.f32 0.0, %v489
    %v491 = vpop.f32.mrf.mxu0
    %v492 = vpop.f32.mrf.mxu0
    %v493 = vadd.f32 0.0, %v492
    %v494 = vpop.f32.mrf.mxu0
    %495 = vmatprep.mubr.bf16.mxu0 %v262
    %496 = vmatmul.mubr.bf16.gmra.mxu0 %v261
    %v497 = vpop.f32.mrf.mxu0
    %v498 = vadd.f32 0.0, %v497
    %v499 = vpop.f32.mrf.mxu0
    %v500 = vpop.f32.mrf.mxu0
    %v501 = vadd.f32 0.0, %v500
    %v502 = vpop.f32.mrf.mxu0
    %503 = vmatprep.mubr.bf16.mxu0 %v264
    %504 = vmatmul.mubr.bf16.gmra.mxu0 %v263
    %v505 = vpop.f32.mrf.mxu0
    %v506 = vadd.f32 0.0, %v505
    %v507 = vpop.f32.mrf.mxu0
    %v508 = vpop.f32.mrf.mxu0
    %v509 = vadd.f32 0.0, %v508
    %v510 = vpop.f32.mrf.mxu0
    %511 = vmatprep.mubr.bf16.mxu0 %v266
    %512 = vmatmul.mubr.bf16.gmra.mxu0 %v265
    %v513 = vpop.f32.mrf.mxu0
    %v514 = vadd.f32 0.0, %v513
    %v515 = vpop.f32.mrf.mxu0
    %v516 = vpop.f32.mrf.mxu0
    %v517 = vadd.f32 0.0, %v516
    %v518 = vpop.f32.mrf.mxu0
    %519 = vmatprep.mubr.bf16.mxu0 %v268
    %520 = vmatmul.mubr.bf16.gmra.mxu0 %v267
    %v521 = vpop.f32.mrf.mxu0
    %v522 = vadd.f32 0.0, %v521
    %v523 = vpop.f32.mrf.mxu0
    %v524 = vpop.f32.mrf.mxu0
    %v525 = vadd.f32 0.0, %v524
    %v526 = vpop.f32.mrf.mxu0
    %527 = vmatprep.mubr.bf16.mxu0 %v270
    %528 = vmatmul.mubr.bf16.gmra.mxu0 %v269
    %v529 = vpop.f32.mrf.mxu0
    %v530 = vadd.f32 0.0, %v529
    %v531 = vpop.f32.mrf.mxu0
    %v532 = vpop.f32.mrf.mxu0
    %v533 = vadd.f32 0.0, %v532
    %v534 = vpop.f32.mrf.mxu0
    %535 = vmatprep.mubr.bf16.mxu0 %v272
    %536 = vmatmul.mubr.bf16.gmra.mxu0 %v271
    %v537 = vpop.f32.mrf.mxu0
    %v538 = vadd.f32 0.0, %v537
    %v539 = vpop.f32.mrf.mxu0
    %v540 = vpop.f32.mrf.mxu0
    %v541 = vadd.f32 0.0, %v540
    %v542 = vpop.f32.mrf.mxu0
    %543 = vmatprep.mubr.bf16.mxu0 %v274
    %544 = vmatmul.mubr.bf16.gmra.mxu0 %v273
    %v545 = vpop.f32.mrf.mxu0
    %v546 = vadd.f32 0.0, %v545
    %v547 = vpop.f32.mrf.mxu0
    %v548 = vpop.f32.mrf.mxu0
    %v549 = vadd.f32 0.0, %v548
    %v550 = vpop.f32.mrf.mxu0
    %551 = vmatprep.mubr.bf16.mxu0 %v276
    %552 = vmatmul.mubr.bf16.gmra.mxu0 %v275
    %v553 = vpop.f32.mrf.mxu0
    %v554 = vadd.f32 0.0, %v553
    %v555 = vpop.f32.mrf.mxu0
    %v556 = vpop.f32.mrf.mxu0
    %v557 = vadd.f32 0.0, %v556
    %v558 = vpop.f32.mrf.mxu0
    %559 = vmatprep.mubr.bf16.mxu0 %v278
    %560 = vmatmul.mubr.bf16.gmra.mxu0 %v277
    %v561 = vpop.f32.mrf.mxu0
    %v562 = vadd.f32 0.0, %v561
    %v563 = vpop.f32.mrf.mxu0
    %v564 = vpop.f32.mrf.mxu0
    %v565 = vadd.f32 0.0, %v564
    %v566 = vpop.f32.mrf.mxu0
    %567 = vdwg.mxu0
    %v568 = vadd.f32 %v55, %v442
    %v569 = vadd.f32 %v56, %v445
    %v570 = vadd.f32 %v57, %v450
    %v571 = vadd.f32 %v58, %v453
    %v572 = vadd.f32 %v59, %v458
    %v573 = vadd.f32 %v60, %v461
    %v574 = vadd.f32 %v61, %v466
    %v575 = vadd.f32 %v62, %v469
    %v576 = vadd.f32 %v63, %v474
    %v577 = vadd.f32 %v64, %v477
    %v578 = vadd.f32 %v65, %v482
    %v579 = vadd.f32 %v66, %v485
    %v580 = vadd.f32 %v67, %v490
    %v581 = vadd.f32 %v68, %v493
    %v582 = vadd.f32 %v69, %v498
    %v583 = vadd.f32 %v70, %v501
    %v584 = vadd.f32 %v71, %v506
    %v585 = vadd.f32 %v72, %v509
    %v586 = vadd.f32 %v73, %v514
    %v587 = vadd.f32 %v74, %v517
    %v588 = vadd.f32 %v75, %v522
    %v589 = vadd.f32 %v76, %v525
    %v590 = vadd.f32 %v77, %v530
    %v591 = vadd.f32 %v78, %v533
    %v592 = vadd.f32 %v79, %v538
    %v593 = vadd.f32 %v80, %v541
    %v594 = vadd.f32 %v81, %v546
    %v595 = vadd.f32 %v82, %v549
    %v596 = vadd.f32 %v83, %v554
    %v597 = vadd.f32 %v84, %v557
    %v598 = vadd.f32 %v85, %v562
    %v599 = vadd.f32 %v86, %v565
    %600 = vst [vmem:[#allocation2] sm:$0xff] %v568
    %601 = vst [vmem:[#allocation2 + $0x8] sm:$0xff] %v569
    %602 = vst [vmem:[#allocation2 + $0x10] sm:$0xff] %v570
    %603 = vst [vmem:[#allocation2 + $0x18] sm:$0xff] %v571
    %604 = vst [vmem:[#allocation2 + $0x20] sm:$0xff] %v572
    %605 = vst [vmem:[#allocation2 + $0x28] sm:$0xff] %v573
    %606 = vst [vmem:[#allocation2 + $0x30] sm:$0xff] %v574
    %607 = vst [vmem:[#allocation2 + $0x38] sm:$0xff] %v575
    %608 = vst [vmem:[#allocation2 + $0x40] sm:$0xff] %v576
    %609 = vst [vmem:[#allocation2 + $0x48] sm:$0xff] %v577
    %610 = vst [vmem:[#allocation2 + $0x50] sm:$0xff] %v578
    %611 = vst [vmem:[#allocation2 + $0x58] sm:$0xff] %v579
    %612 = vst [vmem:[#allocation2 + $0x60] sm:$0xff] %v580
    %613 = vst [vmem:[#allocation2 + $0x68] sm:$0xff] %v581
    %614 = vst [vmem:[#allocation2 + $0x70] sm:$0xff] %v582
    %615 = vst [vmem:[#allocation2 + $0x78] sm:$0xff] %v583
    %616 = vst [vmem:[#allocation2 + $0x80] sm:$0xff] %v584
    %617 = vst [vmem:[#allocation2 + $0x88] sm:$0xff] %v585
    %618 = vst [vmem:[#allocation2 + $0x90] sm:$0xff] %v586
    %619 = vst [vmem:[#allocation2 + $0x98] sm:$0xff] %v587
    %620 = vst [vmem:[#allocation2 + $0xa0] sm:$0xff] %v588
    %621 = vst [vmem:[#allocation2 + $0xa8] sm:$0xff] %v589
    %622 = vst [vmem:[#allocation2 + $0xb0] sm:$0xff] %v590
    %623 = vst [vmem:[#allocation2 + $0xb8] sm:$0xff] %v591
    %624 = vst [vmem:[#allocation2 + $0xc0] sm:$0xff] %v592
    %625 = vst [vmem:[#allocation2 + $0xc8] sm:$0xff] %v593
    %626 = vst [vmem:[#allocation2 + $0xd0] sm:$0xff] %v594
    %627 = vst [vmem:[#allocation2 + $0xd8] sm:$0xff] %v595
    %628 = vst [vmem:[#allocation2 + $0xe0] sm:$0xff] %v596
    %629 = vst [vmem:[#allocation2 + $0xe8] sm:$0xff] %v597
    %630 = vst [vmem:[#allocation2 + $0xf0] sm:$0xff] %v598
    %631 = vst [vmem:[#allocation2 + $0xf8] sm:$0xff] %v599
    // Predicated region
    $region22: #{gcn_forward.1} parent=1 // pred_check
      %p632 = pneg %p19
    $region23: #{gcn_forward.1} parent=1 // pred_check_branch
      %634 = sbr.rel (%p632) target = $region25
    $region24: #{gcn_forward.1} parent=1 // pred_region
      %v635 = vld [vmem:[#allocation2] sm:$0xff]
      %v636 = vld [vmem:[#allocation2 + $0x8] sm:$0xff]
      %v637 = vld [vmem:[#allocation2 + $0x10] sm:$0xff]
      %v638 = vld [vmem:[#allocation2 + $0x18] sm:$0xff]
      %v639 = vld [vmem:[#allocation2 + $0x20] sm:$0xff]
      %v640 = vld [vmem:[#allocation2 + $0x28] sm:$0xff]
      %v641 = vld [vmem:[#allocation2 + $0x30] sm:$0xff]
      %v642 = vld [vmem:[#allocation2 + $0x38] sm:$0xff]
      %v643 = vld [vmem:[#allocation2 + $0x40] sm:$0xff]
      %v644 = vld [vmem:[#allocation2 + $0x48] sm:$0xff]
      %v645 = vld [vmem:[#allocation2 + $0x50] sm:$0xff]
      %v646 = vld [vmem:[#allocation2 + $0x58] sm:$0xff]
      %v647 = vld [vmem:[#allocation2 + $0x60] sm:$0xff]
      %v648 = vld [vmem:[#allocation2 + $0x68] sm:$0xff]
      %v649 = vld [vmem:[#allocation2 + $0x70] sm:$0xff]
      %v650 = vld [vmem:[#allocation2 + $0x78] sm:$0xff]
      %v651 = vld [vmem:[#allocation2 + $0x80] sm:$0xff]
      %v652 = vld [vmem:[#allocation2 + $0x88] sm:$0xff]
      %v653 = vld [vmem:[#allocation2 + $0x90] sm:$0xff]
      %v654 = vld [vmem:[#allocation2 + $0x98] sm:$0xff]
      %v655 = vld [vmem:[#allocation2 + $0xa0] sm:$0xff]
      %v656 = vld [vmem:[#allocation2 + $0xa8] sm:$0xff]
      %v657 = vld [vmem:[#allocation2 + $0xb0] sm:$0xff]
      %v658 = vld [vmem:[#allocation2 + $0xb8] sm:$0xff]
      %v659 = vld [vmem:[#allocation2 + $0xc0] sm:$0xff]
      %v660 = vld [vmem:[#allocation2 + $0xc8] sm:$0xff]
      %v661 = vld [vmem:[#allocation2 + $0xd0] sm:$0xff]
      %v662 = vld [vmem:[#allocation2 + $0xd8] sm:$0xff]
      %v663 = vld [vmem:[#allocation2 + $0xe0] sm:$0xff]
      %v664 = vld [vmem:[#allocation2 + $0xe8] sm:$0xff]
      %v665 = vld [vmem:[#allocation2 + $0xf0] sm:$0xff]
      %v666 = vld [vmem:[#allocation2 + $0xf8] sm:$0xff]
      %v667 = vpack.c.bf16 %v636, %v635
      %v668 = vpack.c.bf16 %v638, %v637
      %v669 = vpack.c.bf16 %v640, %v639
      %v670 = vpack.c.bf16 %v642, %v641
      %v671 = vpack.c.bf16 %v644, %v643
      %v672 = vpack.c.bf16 %v646, %v645
      %v673 = vpack.c.bf16 %v648, %v647
      %v674 = vpack.c.bf16 %v650, %v649
      %v675 = vpack.c.bf16 %v652, %v651
      %v676 = vpack.c.bf16 %v654, %v653
      %v677 = vpack.c.bf16 %v656, %v655
      %v678 = vpack.c.bf16 %v658, %v657
      %v679 = vpack.c.bf16 %v660, %v659
      %v680 = vpack.c.bf16 %v662, %v661
      %v681 = vpack.c.bf16 %v664, %v663
      %v682 = vpack.c.bf16 %v666, %v665
      %v683 = vld [vmem:[%s2] sm:$0xff]
      %v684 = vld [vmem:[%s2 + $0x8] sm:$0xff]
      %v685 = vld [vmem:[%s2 + $0x10] sm:$0xff]
      %v686 = vld [vmem:[%s2 + $0x18] sm:$0xff]
      %v687 = vld [vmem:[%s2 + $0x20] sm:$0xff]
      %v688 = vld [vmem:[%s2 + $0x28] sm:$0xff]
      %v689 = vld [vmem:[%s2 + $0x30] sm:$0xff]
      %v690 = vld [vmem:[%s2 + $0x38] sm:$0xff]
      %v691 = vld [vmem:[%s2 + $0x40] sm:$0xff]
      %v692 = vld [vmem:[%s2 + $0x48] sm:$0xff]
      %v693 = vld [vmem:[%s2 + $0x50] sm:$0xff]
      %v694 = vld [vmem:[%s2 + $0x58] sm:$0xff]
      %v695 = vld [vmem:[%s2 + $0x60] sm:$0xff]
      %v696 = vld [vmem:[%s2 + $0x68] sm:$0xff]
      %v697 = vld [vmem:[%s2 + $0x70] sm:$0xff]
      %v698 = vld [vmem:[%s2 + $0x78] sm:$0xff]
      %v699 = vld [vmem:[%s2 + $0x80] sm:$0xff]
      %v700 = vld [vmem:[%s2 + $0x88] sm:$0xff]
      %v701 = vld [vmem:[%s2 + $0x90] sm:$0xff]
      %v702 = vld [vmem:[%s2 + $0x98] sm:$0xff]
      %v703 = vld [vmem:[%s2 + $0xa0] sm:$0xff]
      %v704 = vld [vmem:[%s2 + $0xa8] sm:$0xff]
      %v705 = vld [vmem:[%s2 + $0xb0] sm:$0xff]
      %v706 = vld [vmem:[%s2 + $0xb8] sm:$0xff]
      %v707 = vld [vmem:[%s2 + $0xc0] sm:$0xff]
      %v708 = vld [vmem:[%s2 + $0xc8] sm:$0xff]
      %v709 = vld [vmem:[%s2 + $0xd0] sm:$0xff]
      %v710 = vld [vmem:[%s2 + $0xd8] sm:$0xff]
      %v711 = vld [vmem:[%s2 + $0xe0] sm:$0xff]
      %v712 = vld [vmem:[%s2 + $0xe8] sm:$0xff]
      %v713 = vld [vmem:[%s2 + $0xf0] sm:$0xff]
      %v714 = vld [vmem:[%s2 + $0xf8] sm:$0xff]
      %v715 = vld [vmem:[%s3] sm:$0xf]
      %v717 = vlaneseq
      %v718 = vshrl.u32 %v717, 7
      %v719 = vsub.s32 0, %v718
      %v720 = vrot.slane %v715, %v719
      %v721 = vlaneseq
      %v722 = vshrl.u32 %v721, 7
      %v723 = vsub.s32 1, %v722
      %v724 = vrot.slane %v715, %v723
      %v725 = vlaneseq
      %v726 = vshrl.u32 %v725, 7
      %v727 = vsub.s32 2, %v726
      %v728 = vrot.slane %v715, %v727
      %v729 = vlaneseq
      %v730 = vshrl.u32 %v729, 7
      %v731 = vsub.s32 3, %v730
      %v732 = vrot.slane %v715, %v731
      %v769 = vunpack.c.l.b16 %v683
      %v770 = vunpack.c.h.b16 %v683
      %v771 = vunpack.c.l.b16 %v684
      %v772 = vunpack.c.h.b16 %v684
      %v773 = vunpack.c.l.b16 %v685
      %v774 = vunpack.c.h.b16 %v685
      %v775 = vunpack.c.l.b16 %v686
      %v776 = vunpack.c.h.b16 %v686
      %v777 = vunpack.c.l.b16 %v687
      %v778 = vunpack.c.h.b16 %v687
      %v779 = vunpack.c.l.b16 %v688
      %v780 = vunpack.c.h.b16 %v688
      %v781 = vunpack.c.l.b16 %v689
      %v782 = vunpack.c.h.b16 %v689
      %v783 = vunpack.c.l.b16 %v690
      %v784 = vunpack.c.h.b16 %v690
      %v785 = vunpack.c.l.b16 %v691
      %v786 = vunpack.c.h.b16 %v691
      %v787 = vunpack.c.l.b16 %v692
      %v788 = vunpack.c.h.b16 %v692
      %v789 = vunpack.c.l.b16 %v693
      %v790 = vunpack.c.h.b16 %v693
      %v791 = vunpack.c.l.b16 %v694
      %v792 = vunpack.c.h.b16 %v694
      %v793 = vunpack.c.l.b16 %v695
      %v794 = vunpack.c.h.b16 %v695
      %v795 = vunpack.c.l.b16 %v696
      %v796 = vunpack.c.h.b16 %v696
      %v797 = vunpack.c.l.b16 %v697
      %v798 = vunpack.c.h.b16 %v697
      %v799 = vunpack.c.l.b16 %v698
      %v800 = vunpack.c.h.b16 %v698
      %v801 = vunpack.c.l.b16 %v699
      %v802 = vunpack.c.h.b16 %v699
      %v803 = vunpack.c.l.b16 %v700
      %v804 = vunpack.c.h.b16 %v700
      %v805 = vunpack.c.l.b16 %v701
      %v806 = vunpack.c.h.b16 %v701
      %v807 = vunpack.c.l.b16 %v702
      %v808 = vunpack.c.h.b16 %v702
      %v809 = vunpack.c.l.b16 %v703
      %v810 = vunpack.c.h.b16 %v703
      %v811 = vunpack.c.l.b16 %v704
      %v812 = vunpack.c.h.b16 %v704
      %v813 = vunpack.c.l.b16 %v705
      %v814 = vunpack.c.h.b16 %v705
      %v815 = vunpack.c.l.b16 %v706
      %v816 = vunpack.c.h.b16 %v706
      %v817 = vunpack.c.l.b16 %v707
      %v818 = vunpack.c.h.b16 %v707
      %v819 = vunpack.c.l.b16 %v708
      %v820 = vunpack.c.h.b16 %v708
      %v821 = vunpack.c.l.b16 %v709
      %v822 = vunpack.c.h.b16 %v709
      %v823 = vunpack.c.l.b16 %v710
      %v824 = vunpack.c.h.b16 %v710
      %v825 = vunpack.c.l.b16 %v711
      %v826 = vunpack.c.h.b16 %v711
      %v827 = vunpack.c.l.b16 %v712
      %v828 = vunpack.c.h.b16 %v712
      %v829 = vunpack.c.l.b16 %v713
      %v830 = vunpack.c.h.b16 %v713
      %v831 = vunpack.c.l.b16 %v714
      %v832 = vunpack.c.h.b16 %v714
      %v833 = vpack.c.b16 %v773, %v769
      %v834 = vpack.c.b16 %v774, %v770
      %v835 = vpack.c.b16 %v775, %v771
      %v836 = vpack.c.b16 %v776, %v772
      %v837 = vpack.c.b16 %v781, %v777
      %v838 = vpack.c.b16 %v782, %v778
      %v839 = vpack.c.b16 %v783, %v779
      %v840 = vpack.c.b16 %v784, %v780
      %v841 = vpack.c.b16 %v789, %v785
      %v842 = vpack.c.b16 %v790, %v786
      %v843 = vpack.c.b16 %v791, %v787
      %v844 = vpack.c.b16 %v792, %v788
      %v845 = vpack.c.b16 %v797, %v793
      %v846 = vpack.c.b16 %v798, %v794
      %v847 = vpack.c.b16 %v799, %v795
      %v848 = vpack.c.b16 %v800, %v796
      %v849 = vpack.c.b16 %v805, %v801
      %v850 = vpack.c.b16 %v806, %v802
      %v851 = vpack.c.b16 %v807, %v803
      %v852 = vpack.c.b16 %v808, %v804
      %v853 = vpack.c.b16 %v813, %v809
      %v854 = vpack.c.b16 %v814, %v810
      %v855 = vpack.c.b16 %v815, %v811
      %v856 = vpack.c.b16 %v816, %v812
      %v857 = vpack.c.b16 %v821, %v817
      %v858 = vpack.c.b16 %v822, %v818
      %v859 = vpack.c.b16 %v823, %v819
      %v860 = vpack.c.b16 %v824, %v820
      %v861 = vpack.c.b16 %v829, %v825
      %v862 = vpack.c.b16 %v830, %v826
      %v863 = vpack.c.b16 %v831, %v827
      %v864 = vpack.c.b16 %v832, %v828
      %897 = vmatprep.subr.bf16.mxu0 %v862
      %898 = vmatpush1.bf16.msra.mxu0 %v861
      %899 = vmatprep.subr.bf16.mxu0 %v858
      %900 = vmatpush1.bf16.msra.mxu0 %v857
      %901 = vmatprep.subr.bf16.mxu0 %v854
      %902 = vmatpush1.bf16.msra.mxu0 %v853
      %903 = vmatprep.subr.bf16.mxu0 %v850
      %904 = vmatpush1.bf16.msra.mxu0 %v849
      %905 = vmatprep.subr.bf16.mxu0 %v846
      %906 = vmatpush1.bf16.msra.mxu0 %v845
      %907 = vmatprep.subr.bf16.mxu0 %v842
      %908 = vmatpush1.bf16.msra.mxu0 %v841
      %909 = vmatprep.subr.bf16.mxu0 %v838
      %910 = vmatpush1.bf16.msra.mxu0 %v837
      %911 = vmatprep.subr.bf16.mxu0 %v834
      %912 = vmatpush1.bf16.msra.mxu0 %v833
      %913 = vmatprep.subr.bf16.mxu0 0
      %914 = vmatpush2.bf16.msra.mxu0 0
      %915 = vmatprep.subr.bf16.mxu0 0
      %916 = vmatpush2.bf16.msra.mxu0 0
      %917 = vmatprep.subr.bf16.mxu0 0
      %918 = vmatpush2.bf16.msra.mxu0 0
      %919 = vmatprep.subr.bf16.mxu0 0
      %920 = vmatpush2.bf16.msra.mxu0 0
      %921 = vmatprep.subr.bf16.mxu0 0
      %922 = vmatpush2.bf16.msra.mxu0 0
      %923 = vmatprep.subr.bf16.mxu0 0
      %924 = vmatpush2.bf16.msra.mxu0 0
      %925 = vmatprep.subr.bf16.mxu0 0
      %926 = vmatpush2.bf16.msra.mxu0 0
      %927 = vmatprep.subr.bf16.mxu0 0
      %928 = vmatpush2.bf16.msra.mxu0 0
      %929 = vmatprep.mubr.bf16.mxu0 0
      %930 = vmatmul.mubr.bf16.gmra.mxu0 %v667
      %v931 = vpop.f32.mrf.mxu0
      %v932 = vadd.f32 %v720, %v931
      %v933 = vpop.f32.mrf.mxu0
      %v934 = vadd.f32 %v724, %v933
      %v935 = vpop.f32.mrf.mxu0
      %v936 = vadd.f32 %v720, %v935
      %v937 = vpop.f32.mrf.mxu0
      %v938 = vadd.f32 %v724, %v937
      %939 = vmatprep.mubr.bf16.mxu0 0
      %940 = vmatmul.mubr.bf16.gmra.mxu0 %v668
      %v941 = vpop.f32.mrf.mxu0
      %v942 = vadd.f32 %v720, %v941
      %v943 = vpop.f32.mrf.mxu0
      %v944 = vadd.f32 %v724, %v943
      %v945 = vpop.f32.mrf.mxu0
      %v946 = vadd.f32 %v720, %v945
      %v947 = vpop.f32.mrf.mxu0
      %v948 = vadd.f32 %v724, %v947
      %949 = vmatprep.mubr.bf16.mxu0 0
      %950 = vmatmul.mubr.bf16.gmra.mxu0 %v669
      %v951 = vpop.f32.mrf.mxu0
      %v952 = vadd.f32 %v720, %v951
      %v953 = vpop.f32.mrf.mxu0
      %v954 = vadd.f32 %v724, %v953
      %v955 = vpop.f32.mrf.mxu0
      %v956 = vadd.f32 %v720, %v955
      %v957 = vpop.f32.mrf.mxu0
      %v958 = vadd.f32 %v724, %v957
      %959 = vmatprep.mubr.bf16.mxu0 0
      %960 = vmatmul.mubr.bf16.gmra.mxu0 %v670
      %v961 = vpop.f32.mrf.mxu0
      %v962 = vadd.f32 %v720, %v961
      %v963 = vpop.f32.mrf.mxu0
      %v964 = vadd.f32 %v724, %v963
      %v965 = vpop.f32.mrf.mxu0
      %v966 = vadd.f32 %v720, %v965
      %v967 = vpop.f32.mrf.mxu0
      %v968 = vadd.f32 %v724, %v967
      %969 = vmatprep.mubr.bf16.mxu0 0
      %970 = vmatmul.mubr.bf16.gmra.mxu0 %v671
      %v971 = vpop.f32.mrf.mxu0
      %v972 = vadd.f32 %v720, %v971
      %v973 = vpop.f32.mrf.mxu0
      %v974 = vadd.f32 %v724, %v973
      %v975 = vpop.f32.mrf.mxu0
      %v976 = vadd.f32 %v720, %v975
      %v977 = vpop.f32.mrf.mxu0
      %v978 = vadd.f32 %v724, %v977
      %979 = vmatprep.mubr.bf16.mxu0 0
      %980 = vmatmul.mubr.bf16.gmra.mxu0 %v672
      %v981 = vpop.f32.mrf.mxu0
      %v982 = vadd.f32 %v720, %v981
      %v983 = vpop.f32.mrf.mxu0
      %v984 = vadd.f32 %v724, %v983
      %v985 = vpop.f32.mrf.mxu0
      %v986 = vadd.f32 %v720, %v985
      %v987 = vpop.f32.mrf.mxu0
      %v988 = vadd.f32 %v724, %v987
      %989 = vmatprep.mubr.bf16.mxu0 0
      %990 = vmatmul.mubr.bf16.gmra.mxu0 %v673
      %v991 = vpop.f32.mrf.mxu0
      %v992 = vadd.f32 %v720, %v991
      %v993 = vpop.f32.mrf.mxu0
      %v994 = vadd.f32 %v724, %v993
      %v995 = vpop.f32.mrf.mxu0
      %v996 = vadd.f32 %v720, %v995
      %v997 = vpop.f32.mrf.mxu0
      %v998 = vadd.f32 %v724, %v997
      %999 = vmatprep.mubr.bf16.mxu0 0
      %1000 = vmatmul.mubr.bf16.gmra.mxu0 %v674
      %v1001 = vpop.f32.mrf.mxu0
      %v1002 = vadd.f32 %v720, %v1001
      %v1003 = vpop.f32.mrf.mxu0
      %v1004 = vadd.f32 %v724, %v1003
      %v1005 = vpop.f32.mrf.mxu0
      %v1006 = vadd.f32 %v720, %v1005
      %v1007 = vpop.f32.mrf.mxu0
      %v1008 = vadd.f32 %v724, %v1007
      %1009 = vmatprep.mubr.bf16.mxu0 0
      %1010 = vmatmul.mubr.bf16.gmra.mxu0 %v675
      %v1011 = vpop.f32.mrf.mxu0
      %v1012 = vadd.f32 %v720, %v1011
      %v1013 = vpop.f32.mrf.mxu0
      %v1014 = vadd.f32 %v724, %v1013
      %v1015 = vpop.f32.mrf.mxu0
      %v1016 = vadd.f32 %v720, %v1015
      %v1017 = vpop.f32.mrf.mxu0
      %v1018 = vadd.f32 %v724, %v1017
      %1019 = vmatprep.mubr.bf16.mxu0 0
      %1020 = vmatmul.mubr.bf16.gmra.mxu0 %v676
      %v1021 = vpop.f32.mrf.mxu0
      %v1022 = vadd.f32 %v720, %v1021
      %v1023 = vpop.f32.mrf.mxu0
      %v1024 = vadd.f32 %v724, %v1023
      %v1025 = vpop.f32.mrf.mxu0
      %v1026 = vadd.f32 %v720, %v1025
      %v1027 = vpop.f32.mrf.mxu0
      %v1028 = vadd.f32 %v724, %v1027
      %1029 = vmatprep.mubr.bf16.mxu0 0
      %1030 = vmatmul.mubr.bf16.gmra.mxu0 %v677
      %v1031 = vpop.f32.mrf.mxu0
      %v1032 = vadd.f32 %v720, %v1031
      %v1033 = vpop.f32.mrf.mxu0
      %v1034 = vadd.f32 %v724, %v1033
      %v1035 = vpop.f32.mrf.mxu0
      %v1036 = vadd.f32 %v720, %v1035
      %v1037 = vpop.f32.mrf.mxu0
      %v1038 = vadd.f32 %v724, %v1037
      %1039 = vmatprep.mubr.bf16.mxu0 0
      %1040 = vmatmul.mubr.bf16.gmra.mxu0 %v678
      %v1041 = vpop.f32.mrf.mxu0
      %v1042 = vadd.f32 %v720, %v1041
      %v1043 = vpop.f32.mrf.mxu0
      %v1044 = vadd.f32 %v724, %v1043
      %v1045 = vpop.f32.mrf.mxu0
      %v1046 = vadd.f32 %v720, %v1045
      %v1047 = vpop.f32.mrf.mxu0
      %v1048 = vadd.f32 %v724, %v1047
      %1049 = vmatprep.mubr.bf16.mxu0 0
      %1050 = vmatmul.mubr.bf16.gmra.mxu0 %v679
      %v1051 = vpop.f32.mrf.mxu0
      %v1052 = vadd.f32 %v720, %v1051
      %v1053 = vpop.f32.mrf.mxu0
      %v1054 = vadd.f32 %v724, %v1053
      %v1055 = vpop.f32.mrf.mxu0
      %v1056 = vadd.f32 %v720, %v1055
      %v1057 = vpop.f32.mrf.mxu0
      %v1058 = vadd.f32 %v724, %v1057
      %1059 = vmatprep.mubr.bf16.mxu0 0
      %1060 = vmatmul.mubr.bf16.gmra.mxu0 %v680
      %v1061 = vpop.f32.mrf.mxu0
      %v1062 = vadd.f32 %v720, %v1061
      %v1063 = vpop.f32.mrf.mxu0
      %v1064 = vadd.f32 %v724, %v1063
      %v1065 = vpop.f32.mrf.mxu0
      %v1066 = vadd.f32 %v720, %v1065
      %v1067 = vpop.f32.mrf.mxu0
      %v1068 = vadd.f32 %v724, %v1067
      %1069 = vmatprep.mubr.bf16.mxu0 0
      %1070 = vmatmul.mubr.bf16.gmra.mxu0 %v681
      %v1071 = vpop.f32.mrf.mxu0
      %v1072 = vadd.f32 %v720, %v1071
      %v1073 = vpop.f32.mrf.mxu0
      %v1074 = vadd.f32 %v724, %v1073
      %v1075 = vpop.f32.mrf.mxu0
      %v1076 = vadd.f32 %v720, %v1075
      %v1077 = vpop.f32.mrf.mxu0
      %v1078 = vadd.f32 %v724, %v1077
      %1079 = vmatprep.mubr.bf16.mxu0 0
      %1080 = vmatmul.mubr.bf16.gmra.mxu0 %v682
      %v1081 = vpop.f32.mrf.mxu0
      %v1082 = vadd.f32 %v720, %v1081
      %v1083 = vpop.f32.mrf.mxu0
      %v1084 = vadd.f32 %v724, %v1083
      %v1085 = vpop.f32.mrf.mxu0
      %v1086 = vadd.f32 %v720, %v1085
      %v1087 = vpop.f32.mrf.mxu0
      %v1088 = vadd.f32 %v724, %v1087
      %1089 = vdwg.mxu0
      %1090 = vmatprep.subr.bf16.mxu0 %v864
      %1091 = vmatpush1.bf16.msra.mxu0 %v863
      %1092 = vmatprep.subr.bf16.mxu0 %v860
      %1093 = vmatpush1.bf16.msra.mxu0 %v859
      %1094 = vmatprep.subr.bf16.mxu0 %v856
      %1095 = vmatpush1.bf16.msra.mxu0 %v855
      %1096 = vmatprep.subr.bf16.mxu0 %v852
      %1097 = vmatpush1.bf16.msra.mxu0 %v851
      %1098 = vmatprep.subr.bf16.mxu0 %v848
      %1099 = vmatpush1.bf16.msra.mxu0 %v847
      %1100 = vmatprep.subr.bf16.mxu0 %v844
      %1101 = vmatpush1.bf16.msra.mxu0 %v843
      %1102 = vmatprep.subr.bf16.mxu0 %v840
      %1103 = vmatpush1.bf16.msra.mxu0 %v839
      %1104 = vmatprep.subr.bf16.mxu0 %v836
      %1105 = vmatpush1.bf16.msra.mxu0 %v835
      %1106 = vmatprep.subr.bf16.mxu0 0
      %1107 = vmatpush2.bf16.msra.mxu0 0
      %1108 = vmatprep.subr.bf16.mxu0 0
      %1109 = vmatpush2.bf16.msra.mxu0 0
      %1110 = vmatprep.subr.bf16.mxu0 0
      %1111 = vmatpush2.bf16.msra.mxu0 0
      %1112 = vmatprep.subr.bf16.mxu0 0
      %1113 = vmatpush2.bf16.msra.mxu0 0
      %1114 = vmatprep.subr.bf16.mxu0 0
      %1115 = vmatpush2.bf16.msra.mxu0 0
      %1116 = vmatprep.subr.bf16.mxu0 0
      %1117 = vmatpush2.bf16.msra.mxu0 0
      %1118 = vmatprep.subr.bf16.mxu0 0
      %1119 = vmatpush2.bf16.msra.mxu0 0
      %1120 = vmatprep.subr.bf16.mxu0 0
      %1121 = vmatpush2.bf16.msra.mxu0 0
      %1122 = vmatprep.mubr.bf16.mxu0 0
      %1123 = vmatmul.mubr.bf16.gmra.mxu0 %v667
      %v1124 = vpop.f32.mrf.mxu0
      %v1125 = vadd.f32 %v728, %v1124
      %v1126 = vpop.f32.mrf.mxu0
      %v1127 = vadd.f32 %v732, %v1126
      %v1128 = vpop.f32.mrf.mxu0
      %v1129 = vadd.f32 %v728, %v1128
      %v1130 = vpop.f32.mrf.mxu0
      %v1131 = vadd.f32 %v732, %v1130
      %1132 = vmatprep.mubr.bf16.mxu0 0
      %1133 = vmatmul.mubr.bf16.gmra.mxu0 %v668
      %v1134 = vpop.f32.mrf.mxu0
      %v1135 = vadd.f32 %v728, %v1134
      %v1136 = vpop.f32.mrf.mxu0
      %v1137 = vadd.f32 %v732, %v1136
      %v1138 = vpop.f32.mrf.mxu0
      %v1139 = vadd.f32 %v728, %v1138
      %v1140 = vpop.f32.mrf.mxu0
      %v1141 = vadd.f32 %v732, %v1140
      %1142 = vmatprep.mubr.bf16.mxu0 0
      %1143 = vmatmul.mubr.bf16.gmra.mxu0 %v669
      %v1144 = vpop.f32.mrf.mxu0
      %v1145 = vadd.f32 %v728, %v1144
      %v1146 = vpop.f32.mrf.mxu0
      %v1147 = vadd.f32 %v732, %v1146
      %v1148 = vpop.f32.mrf.mxu0
      %v1149 = vadd.f32 %v728, %v1148
      %v1150 = vpop.f32.mrf.mxu0
      %v1151 = vadd.f32 %v732, %v1150
      %1152 = vmatprep.mubr.bf16.mxu0 0
      %1153 = vmatmul.mubr.bf16.gmra.mxu0 %v670
      %v1154 = vpop.f32.mrf.mxu0
      %v1155 = vadd.f32 %v728, %v1154
      %v1156 = vpop.f32.mrf.mxu0
      %v1157 = vadd.f32 %v732, %v1156
      %v1158 = vpop.f32.mrf.mxu0
      %v1159 = vadd.f32 %v728, %v1158
      %v1160 = vpop.f32.mrf.mxu0
      %v1161 = vadd.f32 %v732, %v1160
      %1162 = vmatprep.mubr.bf16.mxu0 0
      %1163 = vmatmul.mubr.bf16.gmra.mxu0 %v671
      %v1164 = vpop.f32.mrf.mxu0
      %v1165 = vadd.f32 %v728, %v1164
      %v1166 = vpop.f32.mrf.mxu0
      %v1167 = vadd.f32 %v732, %v1166
      %v1168 = vpop.f32.mrf.mxu0
      %v1169 = vadd.f32 %v728, %v1168
      %v1170 = vpop.f32.mrf.mxu0
      %v1171 = vadd.f32 %v732, %v1170
      %1172 = vmatprep.mubr.bf16.mxu0 0
      %1173 = vmatmul.mubr.bf16.gmra.mxu0 %v672
      %v1174 = vpop.f32.mrf.mxu0
      %v1175 = vadd.f32 %v728, %v1174
      %v1176 = vpop.f32.mrf.mxu0
      %v1177 = vadd.f32 %v732, %v1176
      %v1178 = vpop.f32.mrf.mxu0
      %v1179 = vadd.f32 %v728, %v1178
      %v1180 = vpop.f32.mrf.mxu0
      %v1181 = vadd.f32 %v732, %v1180
      %1182 = vmatprep.mubr.bf16.mxu0 0
      %1183 = vmatmul.mubr.bf16.gmra.mxu0 %v673
      %v1184 = vpop.f32.mrf.mxu0
      %v1185 = vadd.f32 %v728, %v1184
      %v1186 = vpop.f32.mrf.mxu0
      %v1187 = vadd.f32 %v732, %v1186
      %v1188 = vpop.f32.mrf.mxu0
      %v1189 = vadd.f32 %v728, %v1188
      %v1190 = vpop.f32.mrf.mxu0
      %v1191 = vadd.f32 %v732, %v1190
      %1192 = vmatprep.mubr.bf16.mxu0 0
      %1193 = vmatmul.mubr.bf16.gmra.mxu0 %v674
      %v1194 = vpop.f32.mrf.mxu0
      %v1195 = vadd.f32 %v728, %v1194
      %v1196 = vpop.f32.mrf.mxu0
      %v1197 = vadd.f32 %v732, %v1196
      %v1198 = vpop.f32.mrf.mxu0
      %v1199 = vadd.f32 %v728, %v1198
      %v1200 = vpop.f32.mrf.mxu0
      %v1201 = vadd.f32 %v732, %v1200
      %1202 = vmatprep.mubr.bf16.mxu0 0
      %1203 = vmatmul.mubr.bf16.gmra.mxu0 %v675
      %v1204 = vpop.f32.mrf.mxu0
      %v1205 = vadd.f32 %v728, %v1204
      %v1206 = vpop.f32.mrf.mxu0
      %v1207 = vadd.f32 %v732, %v1206
      %v1208 = vpop.f32.mrf.mxu0
      %v1209 = vadd.f32 %v728, %v1208
      %v1210 = vpop.f32.mrf.mxu0
      %v1211 = vadd.f32 %v732, %v1210
      %1212 = vmatprep.mubr.bf16.mxu0 0
      %1213 = vmatmul.mubr.bf16.gmra.mxu0 %v676
      %v1214 = vpop.f32.mrf.mxu0
      %v1215 = vadd.f32 %v728, %v1214
      %v1216 = vpop.f32.mrf.mxu0
      %v1217 = vadd.f32 %v732, %v1216
      %v1218 = vpop.f32.mrf.mxu0
      %v1219 = vadd.f32 %v728, %v1218
      %v1220 = vpop.f32.mrf.mxu0
      %v1221 = vadd.f32 %v732, %v1220
      %1222 = vmatprep.mubr.bf16.mxu0 0
      %1223 = vmatmul.mubr.bf16.gmra.mxu0 %v677
      %v1224 = vpop.f32.mrf.mxu0
      %v1225 = vadd.f32 %v728, %v1224
      %v1226 = vpop.f32.mrf.mxu0
      %v1227 = vadd.f32 %v732, %v1226
      %v1228 = vpop.f32.mrf.mxu0
      %v1229 = vadd.f32 %v728, %v1228
      %v1230 = vpop.f32.mrf.mxu0
      %v1231 = vadd.f32 %v732, %v1230
      %1232 = vmatprep.mubr.bf16.mxu0 0
      %1233 = vmatmul.mubr.bf16.gmra.mxu0 %v678
      %v1234 = vpop.f32.mrf.mxu0
      %v1235 = vadd.f32 %v728, %v1234
      %v1236 = vpop.f32.mrf.mxu0
      %v1237 = vadd.f32 %v732, %v1236
      %v1238 = vpop.f32.mrf.mxu0
      %v1239 = vadd.f32 %v728, %v1238
      %v1240 = vpop.f32.mrf.mxu0
      %v1241 = vadd.f32 %v732, %v1240
      %1242 = vmatprep.mubr.bf16.mxu0 0
      %1243 = vmatmul.mubr.bf16.gmra.mxu0 %v679
      %v1244 = vpop.f32.mrf.mxu0
      %v1245 = vadd.f32 %v728, %v1244
      %v1246 = vpop.f32.mrf.mxu0
      %v1247 = vadd.f32 %v732, %v1246
      %v1248 = vpop.f32.mrf.mxu0
      %v1249 = vadd.f32 %v728, %v1248
      %v1250 = vpop.f32.mrf.mxu0
      %v1251 = vadd.f32 %v732, %v1250
      %1252 = vmatprep.mubr.bf16.mxu0 0
      %1253 = vmatmul.mubr.bf16.gmra.mxu0 %v680
      %v1254 = vpop.f32.mrf.mxu0
      %v1255 = vadd.f32 %v728, %v1254
      %v1256 = vpop.f32.mrf.mxu0
      %v1257 = vadd.f32 %v732, %v1256
      %v1258 = vpop.f32.mrf.mxu0
      %v1259 = vadd.f32 %v728, %v1258
      %v1260 = vpop.f32.mrf.mxu0
      %v1261 = vadd.f32 %v732, %v1260
      %1262 = vmatprep.mubr.bf16.mxu0 0
      %1263 = vmatmul.mubr.bf16.gmra.mxu0 %v681
      %v1264 = vpop.f32.mrf.mxu0
      %v1265 = vadd.f32 %v728, %v1264
      %v1266 = vpop.f32.mrf.mxu0
      %v1267 = vadd.f32 %v732, %v1266
      %v1268 = vpop.f32.mrf.mxu0
      %v1269 = vadd.f32 %v728, %v1268
      %v1270 = vpop.f32.mrf.mxu0
      %v1271 = vadd.f32 %v732, %v1270
      %1272 = vmatprep.mubr.bf16.mxu0 0
      %1273 = vmatmul.mubr.bf16.gmra.mxu0 %v682
      %v1274 = vpop.f32.mrf.mxu0
      %v1275 = vadd.f32 %v728, %v1274
      %v1276 = vpop.f32.mrf.mxu0
      %v1277 = vadd.f32 %v732, %v1276
      %v1278 = vpop.f32.mrf.mxu0
      %v1279 = vadd.f32 %v728, %v1278
      %v1280 = vpop.f32.mrf.mxu0
      %v1281 = vadd.f32 %v732, %v1280
      %1282 = vdwg.mxu0
      %1283 = vst [vmem:[#allocation3] sm:$0xff] %v932
      %1284 = vst [vmem:[#allocation3 + $0x8] sm:$0xff] %v934
      %1285 = vst [vmem:[#allocation3 + $0x10] sm:$0xff] %v1125
      %1286 = vst [vmem:[#allocation3 + $0x18] sm:$0xff] %v1127
      %1287 = vst [vmem:[#allocation3 + $0x20] sm:$0xff] %v936
      %1288 = vst [vmem:[#allocation3 + $0x28] sm:$0xff] %v938
      %1289 = vst [vmem:[#allocation3 + $0x30] sm:$0xff] %v1129
      %1290 = vst [vmem:[#allocation3 + $0x38] sm:$0xff] %v1131
      %1291 = vst [vmem:[#allocation3 + $0x40] sm:$0xff] %v942
      %1292 = vst [vmem:[#allocation3 + $0x48] sm:$0xff] %v944
      %1293 = vst [vmem:[#allocation3 + $0x50] sm:$0xff] %v1135
      %1294 = vst [vmem:[#allocation3 + $0x58] sm:$0xff] %v1137
      %1295 = vst [vmem:[#allocation3 + $0x60] sm:$0xff] %v946
      %1296 = vst [vmem:[#allocation3 + $0x68] sm:$0xff] %v948
      %1297 = vst [vmem:[#allocation3 + $0x70] sm:$0xff] %v1139
      %1298 = vst [vmem:[#allocation3 + $0x78] sm:$0xff] %v1141
      %1299 = vst [vmem:[#allocation3 + $0x80] sm:$0xff] %v952
      %1300 = vst [vmem:[#allocation3 + $0x88] sm:$0xff] %v954
      %1301 = vst [vmem:[#allocation3 + $0x90] sm:$0xff] %v1145
      %1302 = vst [vmem:[#allocation3 + $0x98] sm:$0xff] %v1147
      %1303 = vst [vmem:[#allocation3 + $0xa0] sm:$0xff] %v956
      %1304 = vst [vmem:[#allocation3 + $0xa8] sm:$0xff] %v958
      %1305 = vst [vmem:[#allocation3 + $0xb0] sm:$0xff] %v1149
      %1306 = vst [vmem:[#allocation3 + $0xb8] sm:$0xff] %v1151
      %1307 = vst [vmem:[#allocation3 + $0xc0] sm:$0xff] %v962
      %1308 = vst [vmem:[#allocation3 + $0xc8] sm:$0xff] %v964
      %1309 = vst [vmem:[#allocation3 + $0xd0] sm:$0xff] %v1155
      %1310 = vst [vmem:[#allocation3 + $0xd8] sm:$0xff] %v1157
      %1311 = vst [vmem:[#allocation3 + $0xe0] sm:$0xff] %v966
      %1312 = vst [vmem:[#allocation3 + $0xe8] sm:$0xff] %v968
      %1313 = vst [vmem:[#allocation3 + $0xf0] sm:$0xff] %v1159
      %1314 = vst [vmem:[#allocation3 + $0xf8] sm:$0xff] %v1161
      %1315 = vst [vmem:[#allocation3 + $0x100] sm:$0xff] %v972
      %1316 = vst [vmem:[#allocation3 + $0x108] sm:$0xff] %v974
      %1317 = vst [vmem:[#allocation3 + $0x110] sm:$0xff] %v1165
      %1318 = vst [vmem:[#allocation3 + $0x118] sm:$0xff] %v1167
      %1319 = vst [vmem:[#allocation3 + $0x120] sm:$0xff] %v976
      %1320 = vst [vmem:[#allocation3 + $0x128] sm:$0xff] %v978
      %1321 = vst [vmem:[#allocation3 + $0x130] sm:$0xff] %v1169
      %1322 = vst [vmem:[#allocation3 + $0x138] sm:$0xff] %v1171
      %1323 = vst [vmem:[#allocation3 + $0x140] sm:$0xff] %v982
      %1324 = vst [vmem:[#allocation3 + $0x148] sm:$0xff] %v984
      %1325 = vst [vmem:[#allocation3 + $0x150] sm:$0xff] %v1175
      %1326 = vst [vmem:[#allocation3 + $0x158] sm:$0xff] %v1177
      %1327 = vst [vmem:[#allocation3 + $0x160] sm:$0xff] %v986
      %1328 = vst [vmem:[#allocation3 + $0x168] sm:$0xff] %v988
      %1329 = vst [vmem:[#allocation3 + $0x170] sm:$0xff] %v1179
      %1330 = vst [vmem:[#allocation3 + $0x178] sm:$0xff] %v1181
      %1331 = vst [vmem:[#allocation3 + $0x180] sm:$0xff] %v992
      %1332 = vst [vmem:[#allocation3 + $0x188] sm:$0xff] %v994
      %1333 = vst [vmem:[#allocation3 + $0x190] sm:$0xff] %v1185
      %1334 = vst [vmem:[#allocation3 + $0x198] sm:$0xff] %v1187
      %1335 = vst [vmem:[#allocation3 + $0x1a0] sm:$0xff] %v996
      %1336 = vst [vmem:[#allocation3 + $0x1a8] sm:$0xff] %v998
      %1337 = vst [vmem:[#allocation3 + $0x1b0] sm:$0xff] %v1189
      %1338 = vst [vmem:[#allocation3 + $0x1b8] sm:$0xff] %v1191
      %1339 = vst [vmem:[#allocation3 + $0x1c0] sm:$0xff] %v1002
      %1340 = vst [vmem:[#allocation3 + $0x1c8] sm:$0xff] %v1004
      %1341 = vst [vmem:[#allocation3 + $0x1d0] sm:$0xff] %v1195
      %1342 = vst [vmem:[#allocation3 + $0x1d8] sm:$0xff] %v1197
      %1343 = vst [vmem:[#allocation3 + $0x1e0] sm:$0xff] %v1006
      %1344 = vst [vmem:[#allocation3 + $0x1e8] sm:$0xff] %v1008
      %1345 = vst [vmem:[#allocation3 + $0x1f0] sm:$0xff] %v1199
      %1346 = vst [vmem:[#allocation3 + $0x1f8] sm:$0xff] %v1201
      %1347 = vst [vmem:[#allocation3 + $0x200] sm:$0xff] %v1012
      %1348 = vst [vmem:[#allocation3 + $0x208] sm:$0xff] %v1014
      %1349 = vst [vmem:[#allocation3 + $0x210] sm:$0xff] %v1205
      %1350 = vst [vmem:[#allocation3 + $0x218] sm:$0xff] %v1207
      %1351 = vst [vmem:[#allocation3 + $0x220] sm:$0xff] %v1016
      %1352 = vst [vmem:[#allocation3 + $0x228] sm:$0xff] %v1018
      %1353 = vst [vmem:[#allocation3 + $0x230] sm:$0xff] %v1209
      %1354 = vst [vmem:[#allocation3 + $0x238] sm:$0xff] %v1211
      %1355 = vst [vmem:[#allocation3 + $0x240] sm:$0xff] %v1022
      %1356 = vst [vmem:[#allocation3 + $0x248] sm:$0xff] %v1024
      %1357 = vst [vmem:[#allocation3 + $0x250] sm:$0xff] %v1215
      %1358 = vst [vmem:[#allocation3 + $0x258] sm:$0xff] %v1217
      %1359 = vst [vmem:[#allocation3 + $0x260] sm:$0xff] %v1026
      %1360 = vst [vmem:[#allocation3 + $0x268] sm:$0xff] %v1028
      %1361 = vst [vmem:[#allocation3 + $0x270] sm:$0xff] %v1219
      %1362 = vst [vmem:[#allocation3 + $0x278] sm:$0xff] %v1221
      %1363 = vst [vmem:[#allocation3 + $0x280] sm:$0xff] %v1032
      %1364 = vst [vmem:[#allocation3 + $0x288] sm:$0xff] %v1034
      %1365 = vst [vmem:[#allocation3 + $0x290] sm:$0xff] %v1225
      %1366 = vst [vmem:[#allocation3 + $0x298] sm:$0xff] %v1227
      %1367 = vst [vmem:[#allocation3 + $0x2a0] sm:$0xff] %v1036
      %1368 = vst [vmem:[#allocation3 + $0x2a8] sm:$0xff] %v1038
      %1369 = vst [vmem:[#allocation3 + $0x2b0] sm:$0xff] %v1229
      %1370 = vst [vmem:[#allocation3 + $0x2b8] sm:$0xff] %v1231
      %1371 = vst [vmem:[#allocation3 + $0x2c0] sm:$0xff] %v1042
      %1372 = vst [vmem:[#allocation3 + $0x2c8] sm:$0xff] %v1044
      %1373 = vst [vmem:[#allocation3 + $0x2d0] sm:$0xff] %v1235
      %1374 = vst [vmem:[#allocation3 + $0x2d8] sm:$0xff] %v1237
      %1375 = vst [vmem:[#allocation3 + $0x2e0] sm:$0xff] %v1046
      %1376 = vst [vmem:[#allocation3 + $0x2e8] sm:$0xff] %v1048
      %1377 = vst [vmem:[#allocation3 + $0x2f0] sm:$0xff] %v1239
      %1378 = vst [vmem:[#allocation3 + $0x2f8] sm:$0xff] %v1241
      %1379 = vst [vmem:[#allocation3 + $0x300] sm:$0xff] %v1052
      %1380 = vst [vmem:[#allocation3 + $0x308] sm:$0xff] %v1054
      %1381 = vst [vmem:[#allocation3 + $0x310] sm:$0xff] %v1245
      %1382 = vst [vmem:[#allocation3 + $0x318] sm:$0xff] %v1247
      %1383 = vst [vmem:[#allocation3 + $0x320] sm:$0xff] %v1056
      %1384 = vst [vmem:[#allocation3 + $0x328] sm:$0xff] %v1058
      %1385 = vst [vmem:[#allocation3 + $0x330] sm:$0xff] %v1249
      %1386 = vst [vmem:[#allocation3 + $0x338] sm:$0xff] %v1251
      %1387 = vst [vmem:[#allocation3 + $0x340] sm:$0xff] %v1062
      %1388 = vst [vmem:[#allocation3 + $0x348] sm:$0xff] %v1064
      %1389 = vst [vmem:[#allocation3 + $0x350] sm:$0xff] %v1255
      %1390 = vst [vmem:[#allocation3 + $0x358] sm:$0xff] %v1257
      %1391 = vst [vmem:[#allocation3 + $0x360] sm:$0xff] %v1066
      %1392 = vst [vmem:[#allocation3 + $0x368] sm:$0xff] %v1068
      %1393 = vst [vmem:[#allocation3 + $0x370] sm:$0xff] %v1259
      %1394 = vst [vmem:[#allocation3 + $0x378] sm:$0xff] %v1261
      %1395 = vst [vmem:[#allocation3 + $0x380] sm:$0xff] %v1072
      %1396 = vst [vmem:[#allocation3 + $0x388] sm:$0xff] %v1074
      %1397 = vst [vmem:[#allocation3 + $0x390] sm:$0xff] %v1265
      %1398 = vst [vmem:[#allocation3 + $0x398] sm:$0xff] %v1267
      %1399 = vst [vmem:[#allocation3 + $0x3a0] sm:$0xff] %v1076
      %1400 = vst [vmem:[#allocation3 + $0x3a8] sm:$0xff] %v1078
      %1401 = vst [vmem:[#allocation3 + $0x3b0] sm:$0xff] %v1269
      %1402 = vst [vmem:[#allocation3 + $0x3b8] sm:$0xff] %v1271
      %1403 = vst [vmem:[#allocation3 + $0x3c0] sm:$0xff] %v1082
      %1404 = vst [vmem:[#allocation3 + $0x3c8] sm:$0xff] %v1084
      %1405 = vst [vmem:[#allocation3 + $0x3d0] sm:$0xff] %v1275
      %1406 = vst [vmem:[#allocation3 + $0x3d8] sm:$0xff] %v1277
      %1407 = vst [vmem:[#allocation3 + $0x3e0] sm:$0xff] %v1086
      %1408 = vst [vmem:[#allocation3 + $0x3e8] sm:$0xff] %v1088
      %1409 = vst [vmem:[#allocation3 + $0x3f0] sm:$0xff] %v1279
      %1410 = vst [vmem:[#allocation3 + $0x3f8] sm:$0xff] %v1281
    $region25: #{gcn_forward.1} parent=1 // pred_fallthru
      _
    // Predicated region
    $region26: #{gcn_forward.1} parent=1 // pred_check
      _
    $region27: #{gcn_forward.1} parent=1 // pred_check_branch
      %1412 = sbr.rel (0) target = $region29
    $region28: #{gcn_forward.1} parent=1 // pred_region
      %s1414 = ssub.s32 16384, 16384
      %1415 = vsyncadd [#allocation4], %s1414
      %s1416 = sshll.u32 [#allocation3], 4
      %s1417 = int_to_ptr.vmem [resolvable:$true] %s1416
      %1422 = dma.vmem_to_hbm [thread:$0]  %s1417, 16384, %s4, [#allocation4], 512, 512, 32
    $region29: #{gcn_forward.1} parent=1 // pred_fallthru
      _
    // Predicated region
    $region30: #{gcn_forward.1} parent=1 // pred_check
      _
    $region31: #{gcn_forward.1} parent=1 // pred_check_branch
      %1424 = sbr.rel (0) target = $region33
    $region32: #{gcn_forward.1} parent=1 // pred_region
      %1425 = dma.done [#allocation4], 16384
    $region33: #{gcn_forward.1} parent=1 // pred_fallthru
      _
    %1426 = vsyncpa [#allocation4], 1

</llo_original>
